<compile_context>
chip_gen: v5e
topology: v5e:2x2
jax: 0.10.0
libtpu: 0.0.40
codegen_flags: <defaults>
</compile_context>

<pallas_src>
import functools

import jax
import jax.numpy as jnp
from jax.experimental import pallas as pl
from jax.experimental.pallas import tpu as pltpu

LANE = 128      # TPU vreg lane width
SUBLANE = 8     # TPU vreg sublane count (f32)


def _round_up(n, m):
    return ((n + m - 1) // m) * m


# ----------------------------------------------------------------------------
# Fused kernel, one grid step per LSTM layer:
#   layer 0     : encoder MLP fills seq_scr, then layer-0 recurrence
#   layer 1..L-2: recurrence on previous layer's outputs (held in seq_scr)
#   layer L-1   : recurrence + emitter head on h_n[-1]
# All activations are lane/sublane padded; padded lanes carry exact zeros
# through the recurrence (zero-padded weights/bias => sigmoid(0)*tanh(0)=0).
# ----------------------------------------------------------------------------
def _fused_dad_kernel(x_ref, w1_ref, b1_ref, w2_ref, b2_ref,
                      wih_ref, whh_ref, lb_ref,
                      ew_ref, eb_ref,
                      o_ref,
                      seq_scr, gates_scr,
                      *, t_len, b_pad, h_pad):
    layer = pl.program_id(0)

    # ---- layer 0 only: encoder MLP on all T*B_pad rows (one fused matmul
    # over [design ++ obs ++ (t+1)]) -> sequence scratch (persists across grid)
    @pl.when(layer == 0)
    def _():
        h1 = (jnp.dot(x_ref[...], w1_ref[...],
                      preferred_element_type=jnp.float32)
              + b1_ref[...])
        h1 = jnp.maximum(h1, 0.0).astype(jnp.bfloat16)
        seq_scr[...] = (jnp.dot(h1, w2_ref[...],
                                preferred_element_type=jnp.float32)
                        + b2_ref[...])

    # ---- hoisted input projection for this layer: one batched (TB, H)@(H, 4H)
    # matmul; only h @ W_hh remains on the serial per-step critical path.
    gates_scr[...] = (jnp.dot(seq_scr[...].astype(jnp.bfloat16), wih_ref[0],
                              preferred_element_type=jnp.float32)
                      + lb_ref[0])

    # ---- serial recurrence (T static, fully unrolled; 8 steps per layer so
    # vreg live ranges stay bounded). PyTorch gate order i, f, g, o; gates are
    # packed gate-major so every slice is a clean 128-lane-aligned block.
    w_hh = whh_ref[0]                                   # (H_pad, 4*H_pad) bf16
    h = jnp.zeros((b_pad, h_pad), jnp.float32)
    c = jnp.zeros((b_pad, h_pad), jnp.float32)
    for t in range(t_len):
        g = (gates_scr[t * b_pad:(t + 1) * b_pad, :]
             + jnp.dot(h.astype(jnp.bfloat16), w_hh,
                       preferred_element_type=jnp.float32))
        i_g = jax.nn.sigmoid(g[:, 0 * h_pad:1 * h_pad])
        f_g = jax.nn.sigmoid(g[:, 1 * h_pad:2 * h_pad])
        g_g = jnp.tanh(g[:, 2 * h_pad:3 * h_pad])
        o_g = jax.nn.sigmoid(g[:, 3 * h_pad:4 * h_pad])
        c = f_g * c + i_g * g_g
        h = o_g * jnp.tanh(c)
        # Feed next layer (rows already consumed into gates_scr; harmless on
        # the last layer).
        seq_scr[t * b_pad:(t + 1) * b_pad, :] = h

    # ---- last layer only: emitter head on h_n[-1] (lane-padded output,
    # sliced in the wrapper).
    @pl.when(layer == pl.num_programs(0) - 1)
    def _():
        o_ref[...] = (jnp.dot(h.astype(jnp.bfloat16), ew_ref[...],
                              preferred_element_type=jnp.float32)
                      + eb_ref[...]).astype(o_ref.dtype)


# ----------------------------------------------------------------------------
# Wrapper: builds the fused encoder input [design ++ obs ++ (t+1)] (batch
# padded to a sublane multiple), runs the layer-indexed grid, slices the valid
# (B, DESIGN_DIM) output block.
# ----------------------------------------------------------------------------
def lstm_dad_forward(kparams, designs, observations):
    t_len, batch, dd = designs.shape
    dy = observations.shape[2]

    b_pad = _round_up(batch, SUBLANE)
    in_pad = kparams["w1"].shape[0]
    h_pad = kparams["w_hh"].shape[1]
    num_layers = kparams["w_hh"].shape[0]
    out_pad = kparams["emit_w"].shape[1]
    design_dim = kparams["design_dim"]
    tb = t_len * b_pad

    # Fused encoder input: [design | obs | t+1 | zero pad], bf16 for the MXU.
    d_p = jnp.zeros((t_len, b_pad, dd), jnp.float32).at[:, :batch, :].set(designs)
    y_p = jnp.zeros((t_len, b_pad, dy), jnp.float32).at[:, :batch, :].set(observations)
    t_p = jnp.broadcast_to(
        jnp.arange(1, t_len + 1, dtype=jnp.float32)[:, None, None],
        (t_len, b_pad, 1))
    z_p = jnp.zeros((t_len, b_pad, in_pad - dd - dy - 1), jnp.float32)
    enc_in = jnp.concatenate([d_p, y_p, t_p, z_p], axis=-1)
    enc_in = enc_in.reshape(tb, in_pad).astype(jnp.bfloat16)

    kernel = functools.partial(
        _fused_dad_kernel, t_len=t_len, b_pad=b_pad, h_pad=h_pad)

    def const_spec(shape):
        nd = len(shape)
        return pl.BlockSpec(shape, lambda l, nd=nd: (0,) * nd)

    def layer_spec(shape):  # full shape (L, ...); one layer's block per step
        blk = (1,) + tuple(shape[1:])
        nd = len(shape)
        return pl.BlockSpec(blk, lambda l, nd=nd: (l,) + (0,) * (nd - 1))

    args = (enc_in,
            kparams["w1"], kparams["b1"], kparams["w2"], kparams["b2"],
            kparams["w_ih"], kparams["w_hh"], kparams["lstm_b"],
            kparams["emit_w"], kparams["emit_b"])
    in_specs = [
        const_spec(enc_in.shape),
        const_spec(kparams["w1"].shape),
        const_spec(kparams["b1"].shape),
        const_spec(kparams["w2"].shape),
        const_spec(kparams["b2"].shape),
        layer_spec(kparams["w_ih"].shape),
        layer_spec(kparams["w_hh"].shape),
        layer_spec(kparams["lstm_b"].shape),
        const_spec(kparams["emit_w"].shape),
        const_spec(kparams["emit_b"].shape),
    ]

    out = pl.pallas_call(
        kernel,
        out_shape=jax.ShapeDtypeStruct((b_pad, out_pad), jnp.float32),
        grid=(num_layers,),
        in_specs=in_specs,
        out_specs=pl.BlockSpec((b_pad, out_pad), lambda l: (0, 0)),
        scratch_shapes=[
            pltpu.VMEM((tb, h_pad), jnp.float32),       # per-layer sequence
            pltpu.VMEM((tb, 4 * h_pad), jnp.float32),   # hoisted gate inputs
        ],
        compiler_params=pltpu.CompilerParams(
            dimension_semantics=("arbitrary",)),        # layers are sequential
    )(*args)

    return out[:batch, :design_dim]


# ----------------------------------------------------------------------------
# One-time offline parameter transform: zero-pad everything to lane/sublane-
# dense shapes, cast matmul weights to bf16, pack LSTM gates gate-major (each
# gate's valid 32 columns live at the start of its own 128-lane block).
# ----------------------------------------------------------------------------
def pad_params_for_kernel(params, design_dim, obs_dim):
    dd, dy = design_dim, obs_dim
    enc_w1 = params["enc_w1"]                       # (dd+dy+1, enc_hidden)
    enc_hidden = enc_w1.shape[1]
    encoding_dim = params["enc_w2"].shape[1]
    num_layers = params["lstm_w_ih_t"].shape[0]

    in_pad = max(_round_up(dd + dy + 1, SUBLANE), SUBLANE)
    enc_h_pad = _round_up(enc_hidden, LANE)
    h_pad = _round_up(encoding_dim, LANE)
    out_pad = _round_up(design_dim, LANE)

    def pad_to(x, shape, dtype=jnp.float32):
        z = jnp.zeros(shape, jnp.float32)
        return z.at[tuple(slice(0, s) for s in x.shape)].set(x).astype(dtype)

    # Fused encoder first layer: rows = [design | obs | time] (already that
    # order in enc_w1), zero-padded to in_pad rows.
    w1 = pad_to(enc_w1, (in_pad, enc_h_pad), jnp.bfloat16)
    b1 = pad_to(params["enc_b1"][None, :], (1, enc_h_pad))
    w2 = pad_to(params["enc_w2"], (enc_h_pad, h_pad), jnp.bfloat16)
    b2 = pad_to(params["enc_b2"][None, :], (1, h_pad))

    w_ih = jnp.zeros((num_layers, h_pad, 4 * h_pad), jnp.float32)
    w_hh = jnp.zeros((num_layers, h_pad, 4 * h_pad), jnp.float32)
    lb = jnp.zeros((num_layers, 1, 4 * h_pad), jnp.float32)
    for k in range(4):  # PyTorch gate order i, f, g, o
        src = slice(k * encoding_dim, (k + 1) * encoding_dim)
        dst = slice(k * h_pad, k * h_pad + encoding_dim)
        w_ih = w_ih.at[:, :encoding_dim, dst].set(params["lstm_w_ih_t"][:, :, src])
        w_hh = w_hh.at[:, :encoding_dim, dst].set(params["lstm_w_hh_t"][:, :, src])
        lb = lb.at[:, :, dst].set(params["lstm_b"][:, :, src])
    w_ih = w_ih.astype(jnp.bfloat16)
    w_hh = w_hh.astype(jnp.bfloat16)

    emit_w = pad_to(params["emit_w"], (h_pad, out_pad), jnp.bfloat16)
    emit_b = pad_to(params["emit_b"][None, :], (1, out_pad))

    return {
        "w1": w1, "b1": b1, "w2": w2, "b2": b2,
        "w_ih": w_ih, "w_hh": w_hh, "lstm_b": lb,
        "emit_w": emit_w, "emit_b": emit_b,
        "design_dim": design_dim,
    }


# ----------------------------------------------------------------------------
# Pure-JAX reference (unpadded, f32) for a correctness self-check.
# ----------------------------------------------------------------------------
def _ref_forward(params, designs, observations):
    t_len, batch, _ = designs.shape
    t_feat = jnp.broadcast_to(
        (jnp.arange(1, t_len + 1, dtype=jnp.float32))[:, None, None],
        (t_len, batch, 1),
    )
    enc_in = jnp.concatenate([designs, observations, t_feat], -1).reshape(
        t_len * batch, -1
    )
    h1 = jnp.maximum(enc_in @ params["enc_w1"] + params["enc_b1"], 0.0)
    seq = (h1 @ params["enc_w2"] + params["enc_b2"]).reshape(t_len, batch, -1)

    hidden = seq.shape[-1]
    for layer in range(params["lstm_w_ih_t"].shape[0]):
        h = jnp.zeros((batch, hidden), jnp.float32)
        c = jnp.zeros((batch, hidden), jnp.float32)
        outs = []
        for t in range(t_len):
            gates = (
                seq[t] @ params["lstm_w_ih_t"][layer]
                + h @ params["lstm_w_hh_t"][layer]
                + params["lstm_b"][layer]
            )
            i_g = jax.nn.sigmoid(gates[:, :hidden])
            f_g = jax.nn.sigmoid(gates[:, hidden:2 * hidden])
            g_g = jnp.tanh(gates[:, 2 * hidden:3 * hidden])
            o_g = jax.nn.sigmoid(gates[:, 3 * hidden:])
            c = f_g * c + i_g * g_g
            h = o_g * jnp.tanh(c)
            outs.append(h)
        seq = jnp.stack(outs, 0)
    return h @ params["emit_w"] + params["emit_b"]


# ----------------------------------------------------------------------------
def make_params(key, design_dim, obs_dim, enc_hidden, encoding_dim, num_layers):
    ks = jax.random.split(key, 16)
    d_in = design_dim + obs_dim + 1  # design ++ obs ++ time feature

    def u(k, shape, scale):
        return jax.random.uniform(k, shape, jnp.float32, -scale, scale)

    inv = lambda n: 1.0 / jnp.sqrt(float(n))
    params = {
        "enc_w1": u(ks[0], (d_in, enc_hidden), inv(d_in)),
        "enc_b1": u(ks[1], (enc_hidden,), inv(d_in)),
        "enc_w2": u(ks[2], (enc_hidden, encoding_dim), inv(enc_hidden)),
        "enc_b2": u(ks[3], (encoding_dim,), inv(enc_hidden)),
        # nn.LSTM(encoding_dim, encoding_dim, num_layers): weights stored
        # pre-transposed as (L, H, 4H); bias = b_ih + b_hh, shape (L, 1, 4H).
        "lstm_w_ih_t": u(ks[4], (num_layers, encoding_dim, 4 * encoding_dim),
                         inv(encoding_dim)),
        "lstm_w_hh_t": u(ks[5], (num_layers, encoding_dim, 4 * encoding_dim),
                         inv(encoding_dim)),
        "lstm_b": u(ks[6], (num_layers, 1, 4 * encoding_dim), inv(encoding_dim)),
        "emit_w": u(ks[7], (encoding_dim, design_dim), inv(encoding_dim)),
        "emit_b": u(ks[8], (design_dim,), inv(encoding_dim)),
    }
    return params


if __name__ == "__main__":
    B, T = 2, 8                 # batch, number of (design, obs) history pairs
    DESIGN_DIM, OBS_DIM = 4, 1
    ENC_HIDDEN, ENCODING_DIM = 64, 32
    NUM_LAYERS = 2

    key = jax.random.PRNGKey(0)
    k_par, k_d, k_o = jax.random.split(key, 3)
    params = make_params(k_par, DESIGN_DIM, OBS_DIM, ENC_HIDDEN, ENCODING_DIM,
                         NUM_LAYERS)
    kparams = pad_params_for_kernel(params, DESIGN_DIM, OBS_DIM)

    designs = jax.random.normal(k_d, (T, B, DESIGN_DIM), jnp.float32)
    observations = jax.random.normal(k_o, (T, B, OBS_DIM), jnp.float32)

    out = lstm_dad_forward(kparams, designs, observations)
    out = jax.block_until_ready(out)

    ref = _ref_forward(params, designs, observations)
    assert out.shape == (B, DESIGN_DIM)
    # bf16 MXU operands vs f32 reference -> relaxed tolerance (per review).
    assert jnp.allclose(out, ref, rtol=5e-2, atol=5e-2), "Pallas/JAX mismatch"

    print("KERNEL_OK")
</pallas_src>

<mosaic_0001>
module attributes {stable_mosaic.version = 11 : i64} {
  func.func @_fused_dad_kernel(%arg0: i32, %arg1: memref<64x8xbf16, #tpu.memory_space<vmem>>, %arg2: memref<8x128xbf16, #tpu.memory_space<vmem>>, %arg3: memref<1x128xf32, #tpu.memory_space<vmem>>, %arg4: memref<128x128xbf16, #tpu.memory_space<vmem>>, %arg5: memref<1x128xf32, #tpu.memory_space<vmem>>, %arg6: memref<1x128x512xbf16, #tpu.memory_space<vmem>>, %arg7: memref<1x128x512xbf16, #tpu.memory_space<vmem>>, %arg8: memref<1x1x512xf32, #tpu.memory_space<vmem>>, %arg9: memref<128x128xbf16, #tpu.memory_space<vmem>>, %arg10: memref<1x128xf32, #tpu.memory_space<vmem>>, %arg11: memref<8x128xf32, #tpu.memory_space<vmem>>, %arg12: memref<64x128xf32, #tpu.memory_space<vmem>>, %arg13: memref<64x512xf32, #tpu.memory_space<vmem>>) attributes {dimension_semantics = [#tpu.dimension_semantics<arbitrary>], iteration_bounds = array<i64: 2>, scalar_prefetch = 0 : i64, scratch_operands = 2 : i64, tpu.core_type = #tpu.core_type<tc>, window_params = [{pipeline_mode = #tpu.pipeline_mode<synchronous>, transform_indices = @transform_0, window_bounds = array<i64: 64, 8>}, {pipeline_mode = #tpu.pipeline_mode<synchronous>, transform_indices = @transform_1, window_bounds = array<i64: 8, 128>}, {pipeline_mode = #tpu.pipeline_mode<synchronous>, transform_indices = @transform_2, window_bounds = array<i64: 1, 128>}, {pipeline_mode = #tpu.pipeline_mode<synchronous>, transform_indices = @transform_3, window_bounds = array<i64: 128, 128>}, {pipeline_mode = #tpu.pipeline_mode<synchronous>, transform_indices = @transform_4, window_bounds = array<i64: 1, 128>}, {transform_indices = @transform_5, window_bounds = array<i64: 1, 128, 512>}, {transform_indices = @transform_6, window_bounds = array<i64: 1, 128, 512>}, {transform_indices = @transform_7, window_bounds = array<i64: 1, 1, 512>}, {pipeline_mode = #tpu.pipeline_mode<synchronous>, transform_indices = @transform_8, window_bounds = array<i64: 128, 128>}, {pipeline_mode = #tpu.pipeline_mode<synchronous>, transform_indices = @transform_9, window_bounds = array<i64: 1, 128>}, {pipeline_mode = #tpu.pipeline_mode<synchronous>, transform_indices = @transform_10, window_bounds = array<i64: 8, 128>}]} {
    %c0_i32 = arith.constant 0 : i32
    %0 = arith.cmpi eq, %arg0, %c0_i32 : i32
    %1 = arith.extui %0 : i1 to i32
    %c0_i32_0 = arith.constant 0 : i32
    %2 = arith.cmpi ne, %1, %c0_i32_0 : i32
    scf.if %2 {
      %c0_73 = arith.constant 0 : index
      %c0_74 = arith.constant 0 : index
      %260 = vector.load %arg1[%c0_73, %c0_74] : memref<64x8xbf16, #tpu.memory_space<vmem>>, vector<64x8xbf16>
      %c0_75 = arith.constant 0 : index
      %c0_76 = arith.constant 0 : index
      %261 = vector.load %arg2[%c0_75, %c0_76] : memref<8x128xbf16, #tpu.memory_space<vmem>>, vector<8x128xbf16>
      %cst_77 = arith.constant dense<0.000000e+00> : vector<64x128xf32>
      %262 = tpu.matmul %260, %261, %cst_77 {dimension_numbers = #tpu.dot_dimension_numbers<[1], [0], [0], [1], [0, 0, 1, 1], [], []>} : vector<64x8xbf16>, vector<8x128xbf16>, vector<64x128xf32> -> vector<64x128xf32>
      %c0_78 = arith.constant 0 : index
      %c0_79 = arith.constant 0 : index
      %263 = vector.load %arg3[%c0_78, %c0_79] : memref<1x128xf32, #tpu.memory_space<vmem>>, vector<1x128xf32>
      %264 = vector.broadcast %263 : vector<1x128xf32> to vector<64x128xf32>
      %265 = arith.addf %262, %264 : vector<64x128xf32>
      %cst_80 = arith.constant 0.000000e+00 : f32
      %266 = vector.broadcast %cst_80 : f32 to vector<64x128xf32>
      %267 = arith.maximumf %265, %266 : vector<64x128xf32>
      %268 = arith.truncf %267 : vector<64x128xf32> to vector<64x128xbf16>
      %c0_81 = arith.constant 0 : index
      %c0_82 = arith.constant 0 : index
      %269 = vector.load %arg4[%c0_81, %c0_82] : memref<128x128xbf16, #tpu.memory_space<vmem>>, vector<128x128xbf16>
      %cst_83 = arith.constant dense<0.000000e+00> : vector<64x128xf32>
      %270 = tpu.matmul %268, %269, %cst_83 {dimension_numbers = #tpu.dot_dimension_numbers<[1], [0], [0], [1], [0, 0, 1, 1], [], []>} : vector<64x128xbf16>, vector<128x128xbf16>, vector<64x128xf32> -> vector<64x128xf32>
      %c0_84 = arith.constant 0 : index
      %c0_85 = arith.constant 0 : index
      %271 = vector.load %arg5[%c0_84, %c0_85] : memref<1x128xf32, #tpu.memory_space<vmem>>, vector<1x128xf32>
      %272 = vector.broadcast %271 : vector<1x128xf32> to vector<64x128xf32>
      %273 = arith.addf %270, %272 : vector<64x128xf32>
      %c0_86 = arith.constant 0 : index
      %c0_87 = arith.constant 0 : index
      %274 = vector.load %arg12[%c0_86, %c0_87] : memref<64x128xf32, #tpu.memory_space<vmem>>, vector<64x128xf32>
      tpu.vector_store %arg12[%c0_86, %c0_87], %273 {strides = array<i32>} : memref<64x128xf32, #tpu.memory_space<vmem>>, vector<64x128xf32>,
    } else {
    }
    %c0 = arith.constant 0 : index
    %c0_1 = arith.constant 0 : index
    %3 = vector.load %arg12[%c0, %c0_1] : memref<64x128xf32, #tpu.memory_space<vmem>>, vector<64x128xf32>
    %4 = arith.truncf %3 : vector<64x128xf32> to vector<64x128xbf16>
    %c0_2 = arith.constant 0 : index
    %c0_3 = arith.constant 0 : index
    %c0_4 = arith.constant 0 : index
    %5 = vector.load %arg6[%c0_2, %c0_3, %c0_4] : memref<1x128x512xbf16, #tpu.memory_space<vmem>>, vector<1x128x512xbf16>
    %6 = vector.shape_cast %5 : vector<1x128x512xbf16> to vector<128x512xbf16>
    %cst = arith.constant dense<0.000000e+00> : vector<64x512xf32>
    %7 = tpu.matmul %4, %6, %cst {dimension_numbers = #tpu.dot_dimension_numbers<[1], [0], [0], [1], [0, 0, 1, 1], [], []>} : vector<64x128xbf16>, vector<128x512xbf16>, vector<64x512xf32> -> vector<64x512xf32>
    %c0_5 = arith.constant 0 : index
    %c0_6 = arith.constant 0 : index
    %c0_7 = arith.constant 0 : index
    %8 = vector.load %arg8[%c0_5, %c0_6, %c0_7] : memref<1x1x512xf32, #tpu.memory_space<vmem>>, vector<1x1x512xf32>
    %9 = vector.shape_cast %8 : vector<1x1x512xf32> to vector<1x512xf32>
    %10 = vector.broadcast %9 : vector<1x512xf32> to vector<64x512xf32>
    %11 = arith.addf %7, %10 : vector<64x512xf32>
    %c0_8 = arith.constant 0 : index
    %c0_9 = arith.constant 0 : index
    %12 = vector.load %arg13[%c0_8, %c0_9] : memref<64x512xf32, #tpu.memory_space<vmem>>, vector<64x512xf32>
    tpu.vector_store %arg13[%c0_8, %c0_9], %11 {strides = array<i32>} : memref<64x512xf32, #tpu.memory_space<vmem>>, vector<64x512xf32>,
    %c0_10 = arith.constant 0 : index
    %c0_11 = arith.constant 0 : index
    %c0_12 = arith.constant 0 : index
    %13 = vector.load %arg7[%c0_10, %c0_11, %c0_12] : memref<1x128x512xbf16, #tpu.memory_space<vmem>>, vector<1x128x512xbf16>
    %14 = vector.shape_cast %13 : vector<1x128x512xbf16> to vector<128x512xbf16>
    %cst_13 = arith.constant 0.000000e+00 : f32
    %15 = vector.broadcast %cst_13 : f32 to vector<8x128xf32>
    %cst_14 = arith.constant 0.000000e+00 : f32
    %16 = vector.broadcast %cst_14 : f32 to vector<8x128xf32>
    %c0_15 = arith.constant 0 : index
    %c0_16 = arith.constant 0 : index
    %17 = vector.load %arg13[%c0_15, %c0_16] : memref<64x512xf32, #tpu.memory_space<vmem>>, vector<8x512xf32>
    %18 = arith.truncf %15 : vector<8x128xf32> to vector<8x128xbf16>
    %cst_17 = arith.constant dense<0.000000e+00> : vector<8x512xf32>
    %19 = tpu.matmul %18, %14, %cst_17 {dimension_numbers = #tpu.dot_dimension_numbers<[1], [0], [0], [1], [0, 0, 1, 1], [], []>} : vector<8x128xbf16>, vector<128x512xbf16>, vector<8x512xf32> -> vector<8x512xf32>
    %20 = arith.addf %17, %19 : vector<8x512xf32>
    %21 = vector.extract_strided_slice %20 {offsets = [0, 0], sizes = [8, 128], strides = [1, 1]} : vector<8x512xf32> to vector<8x128xf32>
    %22 = arith.negf %21 : vector<8x128xf32>
    %23 = math.exp %22 : vector<8x128xf32>
    %cst_18 = arith.constant 1.000000e+00 : f32
    %24 = vector.broadcast %cst_18 : f32 to vector<8x128xf32>
    %25 = arith.addf %24, %23 : vector<8x128xf32>
    %26 = arith.divf %24, %25 : vector<8x128xf32>
    %27 = vector.extract_strided_slice %20 {offsets = [0, 128], sizes = [8, 128], strides = [1, 1]} : vector<8x512xf32> to vector<8x128xf32>
    %28 = arith.negf %27 : vector<8x128xf32>
    %29 = math.exp %28 : vector<8x128xf32>
    %cst_19 = arith.constant 1.000000e+00 : f32
    %30 = vector.broadcast %cst_19 : f32 to vector<8x128xf32>
    %31 = arith.addf %30, %29 : vector<8x128xf32>
    %32 = arith.divf %30, %31 : vector<8x128xf32>
    %33 = vector.extract_strided_slice %20 {offsets = [0, 256], sizes = [8, 128], strides = [1, 1]} : vector<8x512xf32> to vector<8x128xf32>
    %34 = math.tanh %33 : vector<8x128xf32>
    %35 = vector.extract_strided_slice %20 {offsets = [0, 384], sizes = [8, 128], strides = [1, 1]} : vector<8x512xf32> to vector<8x128xf32>
    %36 = arith.negf %35 : vector<8x128xf32>
    %37 = math.exp %36 : vector<8x128xf32>
    %cst_20 = arith.constant 1.000000e+00 : f32
    %38 = vector.broadcast %cst_20 : f32 to vector<8x128xf32>
    %39 = arith.addf %38, %37 : vector<8x128xf32>
    %40 = arith.divf %38, %39 : vector<8x128xf32>
    %41 = arith.mulf %32, %16 : vector<8x128xf32>
    %42 = arith.mulf %26, %34 : vector<8x128xf32>
    %43 = arith.addf %41, %42 : vector<8x128xf32>
    %44 = math.tanh %43 : vector<8x128xf32>
    %45 = arith.mulf %40, %44 : vector<8x128xf32>
    %c0_21 = arith.constant 0 : index
    %c0_22 = arith.constant 0 : index
    %46 = vector.load %arg12[%c0_21, %c0_22] : memref<64x128xf32, #tpu.memory_space<vmem>>, vector<8x128xf32>
    tpu.vector_store %arg12[%c0_21, %c0_22], %45 {strides = array<i32>} : memref<64x128xf32, #tpu.memory_space<vmem>>, vector<8x128xf32>,
    %c8 = arith.constant 8 : index
    %c0_23 = arith.constant 0 : index
    %47 = vector.load %arg13[%c8, %c0_23] : memref<64x512xf32, #tpu.memory_space<vmem>>, vector<8x512xf32>
    %48 = arith.truncf %45 : vector<8x128xf32> to vector<8x128xbf16>
    %cst_24 = arith.constant dense<0.000000e+00> : vector<8x512xf32>
    %49 = tpu.matmul %48, %14, %cst_24 {dimension_numbers = #tpu.dot_dimension_numbers<[1], [0], [0], [1], [0, 0, 1, 1], [], []>} : vector<8x128xbf16>, vector<128x512xbf16>, vector<8x512xf32> -> vector<8x512xf32>
    %50 = arith.addf %47, %49 : vector<8x512xf32>
    %51 = vector.extract_strided_slice %50 {offsets = [0, 0], sizes = [8, 128], strides = [1, 1]} : vector<8x512xf32> to vector<8x128xf32>
    %52 = arith.negf %51 : vector<8x128xf32>
    %53 = math.exp %52 : vector<8x128xf32>
    %cst_25 = arith.constant 1.000000e+00 : f32
    %54 = vector.broadcast %cst_25 : f32 to vector<8x128xf32>
    %55 = arith.addf %54, %53 : vector<8x128xf32>
    %56 = arith.divf %54, %55 : vector<8x128xf32>
    %57 = vector.extract_strided_slice %50 {offsets = [0, 128], sizes = [8, 128], strides = [1, 1]} : vector<8x512xf32> to vector<8x128xf32>
    %58 = arith.negf %57 : vector<8x128xf32>
    %59 = math.exp %58 : vector<8x128xf32>
    %cst_26 = arith.constant 1.000000e+00 : f32
    %60 = vector.broadcast %cst_26 : f32 to vector<8x128xf32>
    %61 = arith.addf %60, %59 : vector<8x128xf32>
    %62 = arith.divf %60, %61 : vector<8x128xf32>
    %63 = vector.extract_strided_slice %50 {offsets = [0, 256], sizes = [8, 128], strides = [1, 1]} : vector<8x512xf32> to vector<8x128xf32>
    %64 = math.tanh %63 : vector<8x128xf32>
    %65 = vector.extract_strided_slice %50 {offsets = [0, 384], sizes = [8, 128], strides = [1, 1]} : vector<8x512xf32> to vector<8x128xf32>
    %66 = arith.negf %65 : vector<8x128xf32>
    %67 = math.exp %66 : vector<8x128xf32>
    %cst_27 = arith.constant 1.000000e+00 : f32
    %68 = vector.broadcast %cst_27 : f32 to vector<8x128xf32>
    %69 = arith.addf %68, %67 : vector<8x128xf32>
    %70 = arith.divf %68, %69 : vector<8x128xf32>
    %71 = arith.mulf %62, %43 : vector<8x128xf32>
    %72 = arith.mulf %56, %64 : vector<8x128xf32>
    %73 = arith.addf %71, %72 : vector<8x128xf32>
    %74 = math.tanh %73 : vector<8x128xf32>
    %75 = arith.mulf %70, %74 : vector<8x128xf32>
    %c8_28 = arith.constant 8 : index
    %c0_29 = arith.constant 0 : index
    %76 = vector.load %arg12[%c8_28, %c0_29] : memref<64x128xf32, #tpu.memory_space<vmem>>, vector<8x128xf32>
    tpu.vector_store %arg12[%c8_28, %c0_29], %75 {strides = array<i32>} : memref<64x128xf32, #tpu.memory_space<vmem>>, vector<8x128xf32>,
    %c16 = arith.constant 16 : index
    %c0_30 = arith.constant 0 : index
    %77 = vector.load %arg13[%c16, %c0_30] : memref<64x512xf32, #tpu.memory_space<vmem>>, vector<8x512xf32>
    %78 = arith.truncf %75 : vector<8x128xf32> to vector<8x128xbf16>
    %cst_31 = arith.constant dense<0.000000e+00> : vector<8x512xf32>
    %79 = tpu.matmul %78, %14, %cst_31 {dimension_numbers = #tpu.dot_dimension_numbers<[1], [0], [0], [1], [0, 0, 1, 1], [], []>} : vector<8x128xbf16>, vector<128x512xbf16>, vector<8x512xf32> -> vector<8x512xf32>
    %80 = arith.addf %77, %79 : vector<8x512xf32>
    %81 = vector.extract_strided_slice %80 {offsets = [0, 0], sizes = [8, 128], strides = [1, 1]} : vector<8x512xf32> to vector<8x128xf32>
    %82 = arith.negf %81 : vector<8x128xf32>
    %83 = math.exp %82 : vector<8x128xf32>
    %cst_32 = arith.constant 1.000000e+00 : f32
    %84 = vector.broadcast %cst_32 : f32 to vector<8x128xf32>
    %85 = arith.addf %84, %83 : vector<8x128xf32>
    %86 = arith.divf %84, %85 : vector<8x128xf32>
    %87 = vector.extract_strided_slice %80 {offsets = [0, 128], sizes = [8, 128], strides = [1, 1]} : vector<8x512xf32> to vector<8x128xf32>
    %88 = arith.negf %87 : vector<8x128xf32>
    %89 = math.exp %88 : vector<8x128xf32>
    %cst_33 = arith.constant 1.000000e+00 : f32
    %90 = vector.broadcast %cst_33 : f32 to vector<8x128xf32>
    %91 = arith.addf %90, %89 : vector<8x128xf32>
    %92 = arith.divf %90, %91 : vector<8x128xf32>
    %93 = vector.extract_strided_slice %80 {offsets = [0, 256], sizes = [8, 128], strides = [1, 1]} : vector<8x512xf32> to vector<8x128xf32>
    %94 = math.tanh %93 : vector<8x128xf32>
    %95 = vector.extract_strided_slice %80 {offsets = [0, 384], sizes = [8, 128], strides = [1, 1]} : vector<8x512xf32> to vector<8x128xf32>
    %96 = arith.negf %95 : vector<8x128xf32>
    %97 = math.exp %96 : vector<8x128xf32>
    %cst_34 = arith.constant 1.000000e+00 : f32
    %98 = vector.broadcast %cst_34 : f32 to vector<8x128xf32>
    %99 = arith.addf %98, %97 : vector<8x128xf32>
    %100 = arith.divf %98, %99 : vector<8x128xf32>
    %101 = arith.mulf %92, %73 : vector<8x128xf32>
    %102 = arith.mulf %86, %94 : vector<8x128xf32>
    %103 = arith.addf %101, %102 : vector<8x128xf32>
    %104 = math.tanh %103 : vector<8x128xf32>
    %105 = arith.mulf %100, %104 : vector<8x128xf32>
    %c16_35 = arith.constant 16 : index
    %c0_36 = arith.constant 0 : index
    %106 = vector.load %arg12[%c16_35, %c0_36] : memref<64x128xf32, #tpu.memory_space<vmem>>, vector<8x128xf32>
    tpu.vector_store %arg12[%c16_35, %c0_36], %105 {strides = array<i32>} : memref<64x128xf32, #tpu.memory_space<vmem>>, vector<8x128xf32>,
    %c24 = arith.constant 24 : index
    %c0_37 = arith.constant 0 : index
    %107 = vector.load %arg13[%c24, %c0_37] : memref<64x512xf32, #tpu.memory_space<vmem>>, vector<8x512xf32>
    %108 = arith.truncf %105 : vector<8x128xf32> to vector<8x128xbf16>
    %cst_38 = arith.constant dense<0.000000e+00> : vector<8x512xf32>
    %109 = tpu.matmul %108, %14, %cst_38 {dimension_numbers = #tpu.dot_dimension_numbers<[1], [0], [0], [1], [0, 0, 1, 1], [], []>} : vector<8x128xbf16>, vector<128x512xbf16>, vector<8x512xf32> -> vector<8x512xf32>
    %110 = arith.addf %107, %109 : vector<8x512xf32>
    %111 = vector.extract_strided_slice %110 {offsets = [0, 0], sizes = [8, 128], strides = [1, 1]} : vector<8x512xf32> to vector<8x128xf32>
    %112 = arith.negf %111 : vector<8x128xf32>
    %113 = math.exp %112 : vector<8x128xf32>
    %cst_39 = arith.constant 1.000000e+00 : f32
    %114 = vector.broadcast %cst_39 : f32 to vector<8x128xf32>
    %115 = arith.addf %114, %113 : vector<8x128xf32>
    %116 = arith.divf %114, %115 : vector<8x128xf32>
    %117 = vector.extract_strided_slice %110 {offsets = [0, 128], sizes = [8, 128], strides = [1, 1]} : vector<8x512xf32> to vector<8x128xf32>
    %118 = arith.negf %117 : vector<8x128xf32>
    %119 = math.exp %118 : vector<8x128xf32>
    %cst_40 = arith.constant 1.000000e+00 : f32
    %120 = vector.broadcast %cst_40 : f32 to vector<8x128xf32>
    %121 = arith.addf %120, %119 : vector<8x128xf32>
    %122 = arith.divf %120, %121 : vector<8x128xf32>
    %123 = vector.extract_strided_slice %110 {offsets = [0, 256], sizes = [8, 128], strides = [1, 1]} : vector<8x512xf32> to vector<8x128xf32>
    %124 = math.tanh %123 : vector<8x128xf32>
    %125 = vector.extract_strided_slice %110 {offsets = [0, 384], sizes = [8, 128], strides = [1, 1]} : vector<8x512xf32> to vector<8x128xf32>
    %126 = arith.negf %125 : vector<8x128xf32>
    %127 = math.exp %126 : vector<8x128xf32>
    %cst_41 = arith.constant 1.000000e+00 : f32
    %128 = vector.broadcast %cst_41 : f32 to vector<8x128xf32>
    %129 = arith.addf %128, %127 : vector<8x128xf32>
    %130 = arith.divf %128, %129 : vector<8x128xf32>
    %131 = arith.mulf %122, %103 : vector<8x128xf32>
    %132 = arith.mulf %116, %124 : vector<8x128xf32>
    %133 = arith.addf %131, %132 : vector<8x128xf32>
    %134 = math.tanh %133 : vector<8x128xf32>
    %135 = arith.mulf %130, %134 : vector<8x128xf32>
    %c24_42 = arith.constant 24 : index
    %c0_43 = arith.constant 0 : index
    %136 = vector.load %arg12[%c24_42, %c0_43] : memref<64x128xf32, #tpu.memory_space<vmem>>, vector<8x128xf32>
    tpu.vector_store %arg12[%c24_42, %c0_43], %135 {strides = array<i32>} : memref<64x128xf32, #tpu.memory_space<vmem>>, vector<8x128xf32>,
    %c32 = arith.constant 32 : index
    %c0_44 = arith.constant 0 : index
    %137 = vector.load %arg13[%c32, %c0_44] : memref<64x512xf32, #tpu.memory_space<vmem>>, vector<8x512xf32>
    %138 = arith.truncf %135 : vector<8x128xf32> to vector<8x128xbf16>
    %cst_45 = arith.constant dense<0.000000e+00> : vector<8x512xf32>
    %139 = tpu.matmul %138, %14, %cst_45 {dimension_numbers = #tpu.dot_dimension_numbers<[1], [0], [0], [1], [0, 0, 1, 1], [], []>} : vector<8x128xbf16>, vector<128x512xbf16>, vector<8x512xf32> -> vector<8x512xf32>
    %140 = arith.addf %137, %139 : vector<8x512xf32>
    %141 = vector.extract_strided_slice %140 {offsets = [0, 0], sizes = [8, 128], strides = [1, 1]} : vector<8x512xf32> to vector<8x128xf32>
    %142 = arith.negf %141 : vector<8x128xf32>
    %143 = math.exp %142 : vector<8x128xf32>
    %cst_46 = arith.constant 1.000000e+00 : f32
    %144 = vector.broadcast %cst_46 : f32 to vector<8x128xf32>
    %145 = arith.addf %144, %143 : vector<8x128xf32>
    %146 = arith.divf %144, %145 : vector<8x128xf32>
    %147 = vector.extract_strided_slice %140 {offsets = [0, 128], sizes = [8, 128], strides = [1, 1]} : vector<8x512xf32> to vector<8x128xf32>
    %148 = arith.negf %147 : vector<8x128xf32>
    %149 = math.exp %148 : vector<8x128xf32>
    %cst_47 = arith.constant 1.000000e+00 : f32
    %150 = vector.broadcast %cst_47 : f32 to vector<8x128xf32>
    %151 = arith.addf %150, %149 : vector<8x128xf32>
    %152 = arith.divf %150, %151 : vector<8x128xf32>
    %153 = vector.extract_strided_slice %140 {offsets = [0, 256], sizes = [8, 128], strides = [1, 1]} : vector<8x512xf32> to vector<8x128xf32>
    %154 = math.tanh %153 : vector<8x128xf32>
    %155 = vector.extract_strided_slice %140 {offsets = [0, 384], sizes = [8, 128], strides = [1, 1]} : vector<8x512xf32> to vector<8x128xf32>
    %156 = arith.negf %155 : vector<8x128xf32>
    %157 = math.exp %156 : vector<8x128xf32>
    %cst_48 = arith.constant 1.000000e+00 : f32
    %158 = vector.broadcast %cst_48 : f32 to vector<8x128xf32>
    %159 = arith.addf %158, %157 : vector<8x128xf32>
    %160 = arith.divf %158, %159 : vector<8x128xf32>
    %161 = arith.mulf %152, %133 : vector<8x128xf32>
    %162 = arith.mulf %146, %154 : vector<8x128xf32>
    %163 = arith.addf %161, %162 : vector<8x128xf32>
    %164 = math.tanh %163 : vector<8x128xf32>
    %165 = arith.mulf %160, %164 : vector<8x128xf32>
    %c32_49 = arith.constant 32 : index
    %c0_50 = arith.constant 0 : index
    %166 = vector.load %arg12[%c32_49, %c0_50] : memref<64x128xf32, #tpu.memory_space<vmem>>, vector<8x128xf32>
    tpu.vector_store %arg12[%c32_49, %c0_50], %165 {strides = array<i32>} : memref<64x128xf32, #tpu.memory_space<vmem>>, vector<8x128xf32>,
    %c40 = arith.constant 40 : index
    %c0_51 = arith.constant 0 : index
    %167 = vector.load %arg13[%c40, %c0_51] : memref<64x512xf32, #tpu.memory_space<vmem>>, vector<8x512xf32>
    %168 = arith.truncf %165 : vector<8x128xf32> to vector<8x128xbf16>
    %cst_52 = arith.constant dense<0.000000e+00> : vector<8x512xf32>
    %169 = tpu.matmul %168, %14, %cst_52 {dimension_numbers = #tpu.dot_dimension_numbers<[1], [0], [0], [1], [0, 0, 1, 1], [], []>} : vector<8x128xbf16>, vector<128x512xbf16>, vector<8x512xf32> -> vector<8x512xf32>
    %170 = arith.addf %167, %169 : vector<8x512xf32>
    %171 = vector.extract_strided_slice %170 {offsets = [0, 0], sizes = [8, 128], strides = [1, 1]} : vector<8x512xf32> to vector<8x128xf32>
    %172 = arith.negf %171 : vector<8x128xf32>
    %173 = math.exp %172 : vector<8x128xf32>
    %cst_53 = arith.constant 1.000000e+00 : f32
    %174 = vector.broadcast %cst_53 : f32 to vector<8x128xf32>
    %175 = arith.addf %174, %173 : vector<8x128xf32>
    %176 = arith.divf %174, %175 : vector<8x128xf32>
    %177 = vector.extract_strided_slice %170 {offsets = [0, 128], sizes = [8, 128], strides = [1, 1]} : vector<8x512xf32> to vector<8x128xf32>
    %178 = arith.negf %177 : vector<8x128xf32>
    %179 = math.exp %178 : vector<8x128xf32>
    %cst_54 = arith.constant 1.000000e+00 : f32
    %180 = vector.broadcast %cst_54 : f32 to vector<8x128xf32>
    %181 = arith.addf %180, %179 : vector<8x128xf32>
    %182 = arith.divf %180, %181 : vector<8x128xf32>
    %183 = vector.extract_strided_slice %170 {offsets = [0, 256], sizes = [8, 128], strides = [1, 1]} : vector<8x512xf32> to vector<8x128xf32>
    %184 = math.tanh %183 : vector<8x128xf32>
    %185 = vector.extract_strided_slice %170 {offsets = [0, 384], sizes = [8, 128], strides = [1, 1]} : vector<8x512xf32> to vector<8x128xf32>
    %186 = arith.negf %185 : vector<8x128xf32>
    %187 = math.exp %186 : vector<8x128xf32>
    %cst_55 = arith.constant 1.000000e+00 : f32
    %188 = vector.broadcast %cst_55 : f32 to vector<8x128xf32>
    %189 = arith.addf %188, %187 : vector<8x128xf32>
    %190 = arith.divf %188, %189 : vector<8x128xf32>
    %191 = arith.mulf %182, %163 : vector<8x128xf32>
    %192 = arith.mulf %176, %184 : vector<8x128xf32>
    %193 = arith.addf %191, %192 : vector<8x128xf32>
    %194 = math.tanh %193 : vector<8x128xf32>
    %195 = arith.mulf %190, %194 : vector<8x128xf32>
    %c40_56 = arith.constant 40 : index
    %c0_57 = arith.constant 0 : index
    %196 = vector.load %arg12[%c40_56, %c0_57] : memref<64x128xf32, #tpu.memory_space<vmem>>, vector<8x128xf32>
    tpu.vector_store %arg12[%c40_56, %c0_57], %195 {strides = array<i32>} : memref<64x128xf32, #tpu.memory_space<vmem>>, vector<8x128xf32>,
    %c48 = arith.constant 48 : index
    %c0_58 = arith.constant 0 : index
    %197 = vector.load %arg13[%c48, %c0_58] : memref<64x512xf32, #tpu.memory_space<vmem>>, vector<8x512xf32>
    %198 = arith.truncf %195 : vector<8x128xf32> to vector<8x128xbf16>
    %cst_59 = arith.constant dense<0.000000e+00> : vector<8x512xf32>
    %199 = tpu.matmul %198, %14, %cst_59 {dimension_numbers = #tpu.dot_dimension_numbers<[1], [0], [0], [1], [0, 0, 1, 1], [], []>} : vector<8x128xbf16>, vector<128x512xbf16>, vector<8x512xf32> -> vector<8x512xf32>
    %200 = arith.addf %197, %199 : vector<8x512xf32>
    %201 = vector.extract_strided_slice %200 {offsets = [0, 0], sizes = [8, 128], strides = [1, 1]} : vector<8x512xf32> to vector<8x128xf32>
    %202 = arith.negf %201 : vector<8x128xf32>
    %203 = math.exp %202 : vector<8x128xf32>
    %cst_60 = arith.constant 1.000000e+00 : f32
    %204 = vector.broadcast %cst_60 : f32 to vector<8x128xf32>
    %205 = arith.addf %204, %203 : vector<8x128xf32>
    %206 = arith.divf %204, %205 : vector<8x128xf32>
    %207 = vector.extract_strided_slice %200 {offsets = [0, 128], sizes = [8, 128], strides = [1, 1]} : vector<8x512xf32> to vector<8x128xf32>
    %208 = arith.negf %207 : vector<8x128xf32>
    %209 = math.exp %208 : vector<8x128xf32>
    %cst_61 = arith.constant 1.000000e+00 : f32
    %210 = vector.broadcast %cst_61 : f32 to vector<8x128xf32>
    %211 = arith.addf %210, %209 : vector<8x128xf32>
    %212 = arith.divf %210, %211 : vector<8x128xf32>
    %213 = vector.extract_strided_slice %200 {offsets = [0, 256], sizes = [8, 128], strides = [1, 1]} : vector<8x512xf32> to vector<8x128xf32>
    %214 = math.tanh %213 : vector<8x128xf32>
    %215 = vector.extract_strided_slice %200 {offsets = [0, 384], sizes = [8, 128], strides = [1, 1]} : vector<8x512xf32> to vector<8x128xf32>
    %216 = arith.negf %215 : vector<8x128xf32>
    %217 = math.exp %216 : vector<8x128xf32>
    %cst_62 = arith.constant 1.000000e+00 : f32
    %218 = vector.broadcast %cst_62 : f32 to vector<8x128xf32>
    %219 = arith.addf %218, %217 : vector<8x128xf32>
    %220 = arith.divf %218, %219 : vector<8x128xf32>
    %221 = arith.mulf %212, %193 : vector<8x128xf32>
    %222 = arith.mulf %206, %214 : vector<8x128xf32>
    %223 = arith.addf %221, %222 : vector<8x128xf32>
    %224 = math.tanh %223 : vector<8x128xf32>
    %225 = arith.mulf %220, %224 : vector<8x128xf32>
    %c48_63 = arith.constant 48 : index
    %c0_64 = arith.constant 0 : index
    %226 = vector.load %arg12[%c48_63, %c0_64] : memref<64x128xf32, #tpu.memory_space<vmem>>, vector<8x128xf32>
    tpu.vector_store %arg12[%c48_63, %c0_64], %225 {strides = array<i32>} : memref<64x128xf32, #tpu.memory_space<vmem>>, vector<8x128xf32>,
    %c56 = arith.constant 56 : index
    %c0_65 = arith.constant 0 : index
    %227 = vector.load %arg13[%c56, %c0_65] : memref<64x512xf32, #tpu.memory_space<vmem>>, vector<8x512xf32>
    %228 = arith.truncf %225 : vector<8x128xf32> to vector<8x128xbf16>
    %cst_66 = arith.constant dense<0.000000e+00> : vector<8x512xf32>
    %229 = tpu.matmul %228, %14, %cst_66 {dimension_numbers = #tpu.dot_dimension_numbers<[1], [0], [0], [1], [0, 0, 1, 1], [], []>} : vector<8x128xbf16>, vector<128x512xbf16>, vector<8x512xf32> -> vector<8x512xf32>
    %230 = arith.addf %227, %229 : vector<8x512xf32>
    %231 = vector.extract_strided_slice %230 {offsets = [0, 0], sizes = [8, 128], strides = [1, 1]} : vector<8x512xf32> to vector<8x128xf32>
    %232 = arith.negf %231 : vector<8x128xf32>
    %233 = math.exp %232 : vector<8x128xf32>
    %cst_67 = arith.constant 1.000000e+00 : f32
    %234 = vector.broadcast %cst_67 : f32 to vector<8x128xf32>
    %235 = arith.addf %234, %233 : vector<8x128xf32>
    %236 = arith.divf %234, %235 : vector<8x128xf32>
    %237 = vector.extract_strided_slice %230 {offsets = [0, 128], sizes = [8, 128], strides = [1, 1]} : vector<8x512xf32> to vector<8x128xf32>
    %238 = arith.negf %237 : vector<8x128xf32>
    %239 = math.exp %238 : vector<8x128xf32>
    %cst_68 = arith.constant 1.000000e+00 : f32
    %240 = vector.broadcast %cst_68 : f32 to vector<8x128xf32>
    %241 = arith.addf %240, %239 : vector<8x128xf32>
    %242 = arith.divf %240, %241 : vector<8x128xf32>
    %243 = vector.extract_strided_slice %230 {offsets = [0, 256], sizes = [8, 128], strides = [1, 1]} : vector<8x512xf32> to vector<8x128xf32>
    %244 = math.tanh %243 : vector<8x128xf32>
    %245 = vector.extract_strided_slice %230 {offsets = [0, 384], sizes = [8, 128], strides = [1, 1]} : vector<8x512xf32> to vector<8x128xf32>
    %246 = arith.negf %245 : vector<8x128xf32>
    %247 = math.exp %246 : vector<8x128xf32>
    %cst_69 = arith.constant 1.000000e+00 : f32
    %248 = vector.broadcast %cst_69 : f32 to vector<8x128xf32>
    %249 = arith.addf %248, %247 : vector<8x128xf32>
    %250 = arith.divf %248, %249 : vector<8x128xf32>
    %251 = arith.mulf %242, %223 : vector<8x128xf32>
    %252 = arith.mulf %236, %244 : vector<8x128xf32>
    %253 = arith.addf %251, %252 : vector<8x128xf32>
    %254 = math.tanh %253 : vector<8x128xf32>
    %255 = arith.mulf %250, %254 : vector<8x128xf32>
    %c56_70 = arith.constant 56 : index
    %c0_71 = arith.constant 0 : index
    %256 = vector.load %arg12[%c56_70, %c0_71] : memref<64x128xf32, #tpu.memory_space<vmem>>, vector<8x128xf32>
    tpu.vector_store %arg12[%c56_70, %c0_71], %255 {strides = array<i32>} : memref<64x128xf32, #tpu.memory_space<vmem>>, vector<8x128xf32>,
    %c1_i32 = arith.constant 1 : i32
    %257 = arith.cmpi eq, %arg0, %c1_i32 : i32
    %258 = arith.extui %257 : i1 to i32
    %c0_i32_72 = arith.constant 0 : i32
    %259 = arith.cmpi ne, %258, %c0_i32_72 : i32
    scf.if %259 {
      %260 = arith.truncf %255 : vector<8x128xf32> to vector<8x128xbf16>
      %c0_73 = arith.constant 0 : index
      %c0_74 = arith.constant 0 : index
      %261 = vector.load %arg9[%c0_73, %c0_74] : memref<128x128xbf16, #tpu.memory_space<vmem>>, vector<128x128xbf16>
      %cst_75 = arith.constant dense<0.000000e+00> : vector<8x128xf32>
      %262 = tpu.matmul %260, %261, %cst_75 {dimension_numbers = #tpu.dot_dimension_numbers<[1], [0], [0], [1], [0, 0, 1, 1], [], []>} : vector<8x128xbf16>, vector<128x128xbf16>, vector<8x128xf32> -> vector<8x128xf32>
      %c0_76 = arith.constant 0 : index
      %c0_77 = arith.constant 0 : index
      %263 = vector.load %arg10[%c0_76, %c0_77] : memref<1x128xf32, #tpu.memory_space<vmem>>, vector<1x128xf32>
      %264 = vector.broadcast %263 : vector<1x128xf32> to vector<8x128xf32>
      %265 = arith.addf %262, %264 : vector<8x128xf32>
      %c0_78 = arith.constant 0 : index
      %c0_79 = arith.constant 0 : index
      %266 = vector.load %arg11[%c0_78, %c0_79] : memref<8x128xf32, #tpu.memory_space<vmem>>, vector<8x128xf32>
      tpu.vector_store %arg11[%c0_78, %c0_79], %265 {strides = array<i32>} : memref<8x128xf32, #tpu.memory_space<vmem>>, vector<8x128xf32>,
    } else {
    }
    return
  }
  func.func @transform_0(%arg0: i32) -> (i32, i32) {
    %c0_i32 = arith.constant 0 : i32
    %c0_i32_0 = arith.constant 0 : i32
    %c0_i32_1 = arith.constant 0 : i32
    return %c0_i32, %c0_i32_0 : i32, i32
  }
  func.func @transform_1(%arg0: i32) -> (i32, i32) {
    %c0_i32 = arith.constant 0 : i32
    %c0_i32_0 = arith.constant 0 : i32
    %c0_i32_1 = arith.constant 0 : i32
    return %c0_i32, %c0_i32_0 : i32, i32
  }
  func.func @transform_2(%arg0: i32) -> (i32, i32) {
    %c0_i32 = arith.constant 0 : i32
    %c0_i32_0 = arith.constant 0 : i32
    %c0_i32_1 = arith.constant 0 : i32
    return %c0_i32, %c0_i32_0 : i32, i32
  }
  func.func @transform_3(%arg0: i32) -> (i32, i32) {
    %c0_i32 = arith.constant 0 : i32
    %c0_i32_0 = arith.constant 0 : i32
    %c0_i32_1 = arith.constant 0 : i32
    return %c0_i32, %c0_i32_0 : i32, i32
  }
  func.func @transform_4(%arg0: i32) -> (i32, i32) {
    %c0_i32 = arith.constant 0 : i32
    %c0_i32_0 = arith.constant 0 : i32
    %c0_i32_1 = arith.constant 0 : i32
    return %c0_i32, %c0_i32_0 : i32, i32
  }
  func.func @transform_5(%arg0: i32) -> (i32, i32, i32) {
    %c0_i32 = arith.constant 0 : i32
    %c0_i32_0 = arith.constant 0 : i32
    %c0_i32_1 = arith.constant 0 : i32
    return %arg0, %c0_i32, %c0_i32_0 : i32, i32, i32
  }
  func.func @transform_6(%arg0: i32) -> (i32, i32, i32) {
    %c0_i32 = arith.constant 0 : i32
    %c0_i32_0 = arith.constant 0 : i32
    %c0_i32_1 = arith.constant 0 : i32
    return %arg0, %c0_i32, %c0_i32_0 : i32, i32, i32
  }
  func.func @transform_7(%arg0: i32) -> (i32, i32, i32) {
    %c0_i32 = arith.constant 0 : i32
    %c0_i32_0 = arith.constant 0 : i32
    %c0_i32_1 = arith.constant 0 : i32
    return %arg0, %c0_i32, %c0_i32_0 : i32, i32, i32
  }
  func.func @transform_8(%arg0: i32) -> (i32, i32) {
    %c0_i32 = arith.constant 0 : i32
    %c0_i32_0 = arith.constant 0 : i32
    %c0_i32_1 = arith.constant 0 : i32
    return %c0_i32, %c0_i32_0 : i32, i32
  }
  func.func @transform_9(%arg0: i32) -> (i32, i32) {
    %c0_i32 = arith.constant 0 : i32
    %c0_i32_0 = arith.constant 0 : i32
    %c0_i32_1 = arith.constant 0 : i32
    return %c0_i32, %c0_i32_0 : i32, i32
  }
  func.func @transform_10(%arg0: i32) -> (i32, i32) {
    %c0_i32 = arith.constant 0 : i32
    %c0_i32_0 = arith.constant 0 : i32
    %c0_i32_1 = arith.constant 0 : i32
    return %c0_i32, %c0_i32_0 : i32, i32
  }
}

</mosaic_0001>

<llo_original>
// kernel: tpu_custom_call.1
$region0: #{tpu_custom_call.1}
  #allocation0 [shape = 'u32[]', space=smem, size = 0x4, offset = 0x4, fixed_abs, tag = 'smem constant byte address 0x4 - core index']
  #allocation1 [shape = 'u32[72,128]{1,0:T(1,128)}', space=vmem, size = 0x9000, scoped, tag = 'internal scratch']
  #allocation2 [shape = 'f32[64,128]{1,0:T(8,128)}', space=vmem, size = 0x8000, scoped, tag = 'scratch operand']
  #allocation3 [shape = 'f32[64,512]{1,0:T(8,128)}', space=vmem, size = 0x20000, scoped, tag = 'scratch operand']
  %s0 = inlined_call_operand.vmem [shape: bf16[64,8], index: 0, kind: input, shape index: {}]
  %s1 = inlined_call_operand.vmem [shape: bf16[8,128], index: 1, kind: input, shape index: {}]
  %s2 = inlined_call_operand.vmem [shape: f32[1,128], index: 2, kind: input, shape index: {}]
  %s3 = inlined_call_operand.hbm [shape: bf16[128,128], index: 3, kind: input, shape index: {}]
  %s4 = inlined_call_operand.vmem [shape: f32[1,128], index: 4, kind: input, shape index: {}]
  %s5 = inlined_call_operand.hbm [shape: bf16[2,128,512], index: 5, kind: input, shape index: {}]
  %s6 = inlined_call_operand.hbm [shape: bf16[2,128,512], index: 6, kind: input, shape index: {}]
  %s7 = inlined_call_operand.vmem [shape: f32[2,1,512], index: 7, kind: input, shape index: {}]
  %s8 = inlined_call_operand.hbm [shape: bf16[128,128], index: 8, kind: input, shape index: {}]
  %s9 = inlined_call_operand.vmem [shape: f32[1,128], index: 9, kind: input, shape index: {}]
  %s10 = inlined_call_operand.hbm [shape: f32[8,128], index: 10, kind: output, shape index: {}]
  %s11 = sld [smem:[#allocation0]]
  $region97: #{tpu_custom_call.1} parent=0
    _
  %s13 = ssub.s32 1, %s11
  %s14 = scalar_select 0, %s13, %s11
  $region1: #{tpu_custom_call.1} parent=0
    #allocation4 [shape = 'u8[32768]{0}', space=vmem, size = 0x8000, scoped, tag = 'input window, operand 3, single buffered']
    #allocation5 [shape = 's32[2]{0}', space=sflag, size = 0x8, scoped, tag = 'scoped memory for tpu_custom_call.1']
    #allocation6 [shape = 's32[2]{0}', space=sflag, size = 0x8, scoped, tag = 'scoped memory for tpu_custom_call.1']
    #allocation7 [shape = 'u8[262144]{0}', space=vmem, size = 0x40000, scoped, tag = 'input window, operand 5']
    #allocation8 [shape = 's32[2]{0}', space=sflag, size = 0x8, scoped, tag = 'scoped memory for tpu_custom_call.1']
    #allocation9 [shape = 'u8[262144]{0}', space=vmem, size = 0x40000, scoped, tag = 'input window, operand 6']
    #allocation10 [shape = 'u8[32768]{0}', space=vmem, size = 0x8000, scoped, tag = 'input window, operand 8, single buffered']
    #allocation11 [shape = 's32[1]{0}', space=sflag, size = 0x4, scoped, tag = 'scoped memory for tpu_custom_call.1']
    #allocation12 [shape = 'u8[4096]{0}', space=vmem, size = 0x1000, scoped, tag = 'output window, operand 0, single buffered']
    %15 = vsyncpa [#allocation5], 0
    %16 = vsyncpa [#allocation8], 0
    %s17 = scalar_lea.sflag [#allocation8], 1
    %18 = vsyncpa %s17, 0
    %19 = vsyncpa [#allocation11], 0
    %20 = vsyncpa [#allocation6], 0
    loop: start=0, step=1, limit=4
    $region2: #{tpu_custom_call.1} parent=1 // loop_pre_header
      _
    $region3: #{tpu_custom_call.1} parent=1 // loop_header
      %s22 = sphi 0, %s26
      %p23 = scmp.ge.s32.totalorder %s22, 4
      %s30 = sphi 0, %s30
      %s32 = sphi 0, %s30
      %s33 = sphi 0, %s32
      %s47 = sphi 0, %s33
      %s51 = sphi 0, %s51
      %s53 = sphi 0, %s51
      %s54 = sphi 0, %s53
      %s68 = sphi 0, %s54
      %s72 = sphi 0, %s72
      %s74 = sphi 0, %s72
      %s75 = sphi 0, %s74
      %s89 = sphi 0, %s75
      %s93 = sphi 0, %s93
      %s95 = sphi 0, %s93
      %s96 = sphi 0, %s95
      %s110 = sphi 0, %s96
      %s114 = sphi 0, %s114
      %s116 = sphi 0, %s114
      %s117 = sphi 0, %s116
      %s131 = sphi 0, %s117
      %s137 = sphi 0, %s139
      %s140 = sphi 0, %s137
      %s141 = sphi 0, %s140
      %s157 = sphi 0, %s141
      %s163 = sphi 0, %s165
      %s166 = sphi 0, %s163
      %s167 = sphi 0, %s166
      %s183 = sphi 0, %s167
      %s189 = sphi 0, %s191
      %s192 = sphi 0, %s189
      %s193 = sphi 0, %s192
      %s209 = sphi 0, %s193
      %s213 = sphi 0, %s213
      %s215 = sphi 0, %s213
      %s216 = sphi 0, %s215
      %s230 = sphi 0, %s216
      %s234 = sphi 0, %s234
      %s236 = sphi 0, %s234
      %s237 = sphi 0, %s236
      %s251 = sphi 0, %s237
      %s255 = sphi 0, %s255
      %s257 = sphi 0, %s255
      %s258 = sphi 0, %s257
      %s272 = sphi 0, %s258
    $region4: #{tpu_custom_call.1} parent=1 // loop_header_branch
      %25 = sbr.rel (%p23) target = $region8
    $region5: #{tpu_custom_call.1} parent=1 // loop_body
      %s27 = ssub.s32 %s22, 1
      %s28 = ssub.s32 %s22, 2
      %s29 = sadd.s32 %s22, 1
      %s31 = sadd.s32 %s30, 1
      %p34 = scmp.eq.s32.totalorder %s22, 1
      %p35 = scmp.ne.s32.totalorder %s30, %s32
      %p36 = scmp.eq.s32.totalorder %s22, 0
      %p37 = por %p35, %p36
      %p38 = scmp.ne.s32.totalorder %s30, %s32
      %p39 = scmp.eq.s32.totalorder %s27, 1
      %p40 = por %p38, %p39
      %p41 = scmp.ne.s32.totalorder %s32, %s33
      %p42 = scmp.eq.s32.totalorder %s27, 0
      %p43 = por %p41, %p42
      %p44 = scmp.ne.s32.totalorder %s32, %s33
      %p45 = scmp.eq.s32.totalorder %s28, 1
      %p46 = por %p44, %p45
      %p48 = scmp.ne.s32.totalorder %s33, %s47
      %p49 = scmp.eq.s32.totalorder %s28, 0
      %p50 = por %p48, %p49
      %s52 = sadd.s32 %s51, 1
      %p55 = scmp.eq.s32.totalorder %s22, 1
      %p56 = scmp.ne.s32.totalorder %s51, %s53
      %p57 = scmp.eq.s32.totalorder %s22, 0
      %p58 = por %p56, %p57
      %p59 = scmp.ne.s32.totalorder %s51, %s53
      %p60 = scmp.eq.s32.totalorder %s27, 1
      %p61 = por %p59, %p60
      %p62 = scmp.ne.s32.totalorder %s53, %s54
      %p63 = scmp.eq.s32.totalorder %s27, 0
      %p64 = por %p62, %p63
      %p65 = scmp.ne.s32.totalorder %s53, %s54
      %p66 = scmp.eq.s32.totalorder %s28, 1
      %p67 = por %p65, %p66
      %p69 = scmp.ne.s32.totalorder %s54, %s68
      %p70 = scmp.eq.s32.totalorder %s28, 0
      %p71 = por %p69, %p70
      %s73 = sadd.s32 %s72, 1
      %p76 = scmp.eq.s32.totalorder %s22, 1
      %p77 = scmp.ne.s32.totalorder %s72, %s74
      %p78 = scmp.eq.s32.totalorder %s22, 0
      %p79 = por %p77, %p78
      %p80 = scmp.ne.s32.totalorder %s72, %s74
      %p81 = scmp.eq.s32.totalorder %s27, 1
      %p82 = por %p80, %p81
      %p83 = scmp.ne.s32.totalorder %s74, %s75
      %p84 = scmp.eq.s32.totalorder %s27, 0
      %p85 = por %p83, %p84
      %p86 = scmp.ne.s32.totalorder %s74, %s75
      %p87 = scmp.eq.s32.totalorder %s28, 1
      %p88 = por %p86, %p87
      %p90 = scmp.ne.s32.totalorder %s75, %s89
      %p91 = scmp.eq.s32.totalorder %s28, 0
      %p92 = por %p90, %p91
      %s94 = sadd.s32 %s93, 1
      %p97 = scmp.eq.s32.totalorder %s22, 1
      %p98 = scmp.ne.s32.totalorder %s93, %s95
      %p99 = scmp.eq.s32.totalorder %s22, 0
      %p100 = por %p98, %p99
      %p101 = scmp.ne.s32.totalorder %s93, %s95
      %p102 = scmp.eq.s32.totalorder %s27, 1
      %p103 = por %p101, %p102
      %p104 = scmp.ne.s32.totalorder %s95, %s96
      %p105 = scmp.eq.s32.totalorder %s27, 0
      %p106 = por %p104, %p105
      %p107 = scmp.ne.s32.totalorder %s95, %s96
      %p108 = scmp.eq.s32.totalorder %s28, 1
      %p109 = por %p107, %p108
      %p111 = scmp.ne.s32.totalorder %s96, %s110
      %p112 = scmp.eq.s32.totalorder %s28, 0
      %p113 = por %p111, %p112
      %s115 = sadd.s32 %s114, 1
      %p118 = scmp.eq.s32.totalorder %s22, 1
      %p119 = scmp.ne.s32.totalorder %s114, %s116
      %p120 = scmp.eq.s32.totalorder %s22, 0
      %p121 = por %p119, %p120
      %p122 = scmp.ne.s32.totalorder %s114, %s116
      %p123 = scmp.eq.s32.totalorder %s27, 1
      %p124 = por %p122, %p123
      %p125 = scmp.ne.s32.totalorder %s116, %s117
      %p126 = scmp.eq.s32.totalorder %s27, 0
      %p127 = por %p125, %p126
      %p128 = scmp.ne.s32.totalorder %s116, %s117
      %p129 = scmp.eq.s32.totalorder %s28, 1
      %p130 = por %p128, %p129
      %p132 = scmp.ne.s32.totalorder %s117, %s131
      %p133 = scmp.eq.s32.totalorder %s28, 0
      %p134 = por %p132, %p133
      %s135 = ssub.s32 %s22, %s29
      %p136 = scmp.eq.s32.totalorder %s135, 0
      %s138 = sadd.s32 %s137, 1
      %s139 = scalar_select %p136, %s137, %s138
      %p142 = pneg %p136
      %p143 = scmp.eq.s32.totalorder %s22, 1
      %p144 = por %p142, %p143
      %p145 = scmp.ne.s32.totalorder %s137, %s140
      %p146 = scmp.eq.s32.totalorder %s22, 0
      %p147 = por %p145, %p146
      %p148 = scmp.ne.s32.totalorder %s137, %s140
      %p149 = scmp.eq.s32.totalorder %s27, 1
      %p150 = por %p148, %p149
      %p151 = scmp.ne.s32.totalorder %s140, %s141
      %p152 = scmp.eq.s32.totalorder %s27, 0
      %p153 = por %p151, %p152
      %p154 = scmp.ne.s32.totalorder %s140, %s141
      %p155 = scmp.eq.s32.totalorder %s28, 1
      %p156 = por %p154, %p155
      %p158 = scmp.ne.s32.totalorder %s141, %s157
      %p159 = scmp.eq.s32.totalorder %s28, 0
      %p160 = por %p158, %p159
      %s161 = ssub.s32 %s22, %s29
      %p162 = scmp.eq.s32.totalorder %s161, 0
      %s164 = sadd.s32 %s163, 1
      %s165 = scalar_select %p162, %s163, %s164
      %p168 = pneg %p162
      %p169 = scmp.eq.s32.totalorder %s22, 1
      %p170 = por %p168, %p169
      %p171 = scmp.ne.s32.totalorder %s163, %s166
      %p172 = scmp.eq.s32.totalorder %s22, 0
      %p173 = por %p171, %p172
      %p174 = scmp.ne.s32.totalorder %s163, %s166
      %p175 = scmp.eq.s32.totalorder %s27, 1
      %p176 = por %p174, %p175
      %p177 = scmp.ne.s32.totalorder %s166, %s167
      %p178 = scmp.eq.s32.totalorder %s27, 0
      %p179 = por %p177, %p178
      %p180 = scmp.ne.s32.totalorder %s166, %s167
      %p181 = scmp.eq.s32.totalorder %s28, 1
      %p182 = por %p180, %p181
      %p184 = scmp.ne.s32.totalorder %s167, %s183
      %p185 = scmp.eq.s32.totalorder %s28, 0
      %p186 = por %p184, %p185
      %s187 = ssub.s32 %s22, %s29
      %p188 = scmp.eq.s32.totalorder %s187, 0
      %s190 = sadd.s32 %s189, 1
      %s191 = scalar_select %p188, %s189, %s190
      %p194 = pneg %p188
      %p195 = scmp.eq.s32.totalorder %s22, 1
      %p196 = por %p194, %p195
      %p197 = scmp.ne.s32.totalorder %s189, %s192
      %p198 = scmp.eq.s32.totalorder %s22, 0
      %p199 = por %p197, %p198
      %p200 = scmp.ne.s32.totalorder %s189, %s192
      %p201 = scmp.eq.s32.totalorder %s27, 1
      %p202 = por %p200, %p201
      %p203 = scmp.ne.s32.totalorder %s192, %s193
      %p204 = scmp.eq.s32.totalorder %s27, 0
      %p205 = por %p203, %p204
      %p206 = scmp.ne.s32.totalorder %s192, %s193
      %p207 = scmp.eq.s32.totalorder %s28, 1
      %p208 = por %p206, %p207
      %p210 = scmp.ne.s32.totalorder %s193, %s209
      %p211 = scmp.eq.s32.totalorder %s28, 0
      %p212 = por %p210, %p211
      %s214 = sadd.s32 %s213, 1
      %p217 = scmp.eq.s32.totalorder %s22, 1
      %p218 = scmp.ne.s32.totalorder %s213, %s215
      %p219 = scmp.eq.s32.totalorder %s22, 0
      %p220 = por %p218, %p219
      %p221 = scmp.ne.s32.totalorder %s213, %s215
      %p222 = scmp.eq.s32.totalorder %s27, 1
      %p223 = por %p221, %p222
      %p224 = scmp.ne.s32.totalorder %s215, %s216
      %p225 = scmp.eq.s32.totalorder %s27, 0
      %p226 = por %p224, %p225
      %p227 = scmp.ne.s32.totalorder %s215, %s216
      %p228 = scmp.eq.s32.totalorder %s28, 1
      %p229 = por %p227, %p228
      %p231 = scmp.ne.s32.totalorder %s216, %s230
      %p232 = scmp.eq.s32.totalorder %s28, 0
      %p233 = por %p231, %p232
      %s235 = sadd.s32 %s234, 1
      %p238 = scmp.eq.s32.totalorder %s22, 1
      %p239 = scmp.ne.s32.totalorder %s234, %s236
      %p240 = scmp.eq.s32.totalorder %s22, 0
      %p241 = por %p239, %p240
      %p242 = scmp.ne.s32.totalorder %s234, %s236
      %p243 = scmp.eq.s32.totalorder %s27, 1
      %p244 = por %p242, %p243
      %p245 = scmp.ne.s32.totalorder %s236, %s237
      %p246 = scmp.eq.s32.totalorder %s27, 0
      %p247 = por %p245, %p246
      %p248 = scmp.ne.s32.totalorder %s236, %s237
      %p249 = scmp.eq.s32.totalorder %s28, 1
      %p250 = por %p248, %p249
      %p252 = scmp.ne.s32.totalorder %s237, %s251
      %p253 = scmp.eq.s32.totalorder %s28, 0
      %p254 = por %p252, %p253
      %s256 = sadd.s32 %s255, 1
      %p259 = scmp.eq.s32.totalorder %s22, 1
      %p260 = scmp.ne.s32.totalorder %s255, %s257
      %p261 = scmp.eq.s32.totalorder %s22, 0
      %p262 = por %p260, %p261
      %p263 = scmp.ne.s32.totalorder %s255, %s257
      %p264 = scmp.eq.s32.totalorder %s27, 1
      %p265 = por %p263, %p264
      %p266 = scmp.ne.s32.totalorder %s257, %s258
      %p267 = scmp.eq.s32.totalorder %s27, 0
      %p268 = por %p266, %p267
      %p269 = scmp.ne.s32.totalorder %s257, %s258
      %p270 = scmp.eq.s32.totalorder %s28, 1
      %p271 = por %p269, %p270
      %p273 = scmp.ne.s32.totalorder %s258, %s272
      %p274 = scmp.eq.s32.totalorder %s28, 0
      %p275 = por %p273, %p274
      %p276 = scmp.le.s32.totalorder 1, %s22
      %p277 = scmp.lt.s32.totalorder %s22, 3
      %p278 = pnand %p276, %p277
      %p279 = pneg %p278
      // Predicated region
      $region9: #{tpu_custom_call.1} parent=5 // pred_check
        _
      $region10: #{tpu_custom_call.1} parent=5 // pred_check_branch
        %281 = sbr.rel (%p278) target = $region12
      $region11: #{tpu_custom_call.1} parent=5 // pred_region
        %s282 = ssub.s32 %s22, 1
        // Predicated region
        $region13: #{tpu_custom_call.1} parent=11 // pred_check
          %p283 = pneg %p43
        $region14: #{tpu_custom_call.1} parent=11 // pred_check_branch
          %285 = sbr.rel (%p283) target = $region16
        $region15: #{tpu_custom_call.1} parent=11 // pred_region
          _
        $region16: #{tpu_custom_call.1} parent=11 // pred_fallthru
          _
        // Predicated region
        $region17: #{tpu_custom_call.1} parent=11 // pred_check
          %p286 = pneg %p64
        $region18: #{tpu_custom_call.1} parent=11 // pred_check_branch
          %288 = sbr.rel (%p286) target = $region20
        $region19: #{tpu_custom_call.1} parent=11 // pred_region
          _
        $region20: #{tpu_custom_call.1} parent=11 // pred_fallthru
          _
        // Predicated region
        $region21: #{tpu_custom_call.1} parent=11 // pred_check
          %p289 = pneg %p85
        $region22: #{tpu_custom_call.1} parent=11 // pred_check_branch
          %291 = sbr.rel (%p289) target = $region24
        $region23: #{tpu_custom_call.1} parent=11 // pred_region
          _
        $region24: #{tpu_custom_call.1} parent=11 // pred_fallthru
          _
        // Predicated region
        $region25: #{tpu_custom_call.1} parent=11 // pred_check
          %p292 = pneg %p106
        $region26: #{tpu_custom_call.1} parent=11 // pred_check_branch
          %294 = sbr.rel (%p292) target = $region28
        $region27: #{tpu_custom_call.1} parent=11 // pred_region
          %296 = vsyncadd [#allocation5], 0
          %s297 = sshll.u32 %s3, 4
          %s298 = int_to_ptr.hbm [resolvable:$true] %s297
          %s299 = sshll.u32 [#allocation4], 4
          %s300 = int_to_ptr.vmem [resolvable:$true] %s299
          %305 = dma.hbm_to_vmem [thread:$0]  %s298, 1024, %s300, [#allocation5], 64, 64, 4
        $region28: #{tpu_custom_call.1} parent=11 // pred_fallthru
          _
        // Predicated region
        $region29: #{tpu_custom_call.1} parent=11 // pred_check
          %p306 = pneg %p127
        $region30: #{tpu_custom_call.1} parent=11 // pred_check_branch
          %308 = sbr.rel (%p306) target = $region32
        $region31: #{tpu_custom_call.1} parent=11 // pred_region
          _
        $region32: #{tpu_custom_call.1} parent=11 // pred_fallthru
          _
        // Predicated region
        $region33: #{tpu_custom_call.1} parent=11 // pred_check
          %p309 = pneg %p226
        $region34: #{tpu_custom_call.1} parent=11 // pred_check_branch
          %311 = sbr.rel (%p309) target = $region36
        $region35: #{tpu_custom_call.1} parent=11 // pred_region
          %313 = vsyncadd [#allocation11], 0
          %s314 = sshll.u32 %s8, 4
          %s315 = int_to_ptr.hbm [resolvable:$true] %s314
          %s316 = sshll.u32 [#allocation10], 4
          %s317 = int_to_ptr.vmem [resolvable:$true] %s316
          %322 = dma.hbm_to_vmem [thread:$0]  %s315, 1024, %s317, [#allocation11], 64, 64, 4
        $region36: #{tpu_custom_call.1} parent=11 // pred_fallthru
          _
        // Predicated region
        $region37: #{tpu_custom_call.1} parent=11 // pred_check
          %p323 = pneg %p247
        $region38: #{tpu_custom_call.1} parent=11 // pred_check_branch
          %325 = sbr.rel (%p323) target = $region40
        $region39: #{tpu_custom_call.1} parent=11 // pred_region
          _
        $region40: #{tpu_custom_call.1} parent=11 // pred_fallthru
          _
      $region12: #{tpu_custom_call.1} parent=5 // pred_fallthru
        _
      %p326 = scmp.lt.s32.totalorder %s22, 2
      // Predicated region
      $region41: #{tpu_custom_call.1} parent=5 // pred_check
        %p327 = pneg %p326
      $region42: #{tpu_custom_call.1} parent=5 // pred_check_branch
        %329 = sbr.rel (%p327) target = $region44
      $region43: #{tpu_custom_call.1} parent=5 // pred_region
        // Predicated region
        $region45: #{tpu_custom_call.1} parent=43 // pred_check
          %p330 = pneg %p147
        $region46: #{tpu_custom_call.1} parent=43 // pred_check_branch
          %332 = sbr.rel (%p330) target = $region48
        $region47: #{tpu_custom_call.1} parent=43 // pred_region
          %s333 = sand.u32 %s22, 1
          %s334 = scalar_lea.sflag [#allocation8], %s333
          %s335 = sand.u32 %s137, 1
          %s336 = smul.addr %s335, 256
          %s337 = scalar_lea.vmem [#allocation7], %s336
          %339 = vsyncadd %s334, 0
          %s340 = smul.addr %s22, 64
          %s341 = smul.addr %s340, 4
          %s342 = scalar_lea.hbm %s5, %s341
          %s343 = sshll.u32 %s342, 4
          %s344 = int_to_ptr.hbm [resolvable:$true] %s343
          %s345 = sshll.u32 %s337, 4
          %s346 = int_to_ptr.vmem [resolvable:$true] %s345
          %351 = dma.hbm_to_vmem [thread:$0]  %s344, 4096, %s346, %s334, 256, 256, 16
        $region48: #{tpu_custom_call.1} parent=43 // pred_fallthru
          _
        // Predicated region
        $region49: #{tpu_custom_call.1} parent=43 // pred_check
          %p352 = pneg %p173
        $region50: #{tpu_custom_call.1} parent=43 // pred_check_branch
          %354 = sbr.rel (%p352) target = $region52
        $region51: #{tpu_custom_call.1} parent=43 // pred_region
          %s355 = sand.u32 %s22, 1
          %s356 = scalar_lea.sflag [#allocation8], %s355
          %s357 = sand.u32 %s163, 1
          %s358 = smul.addr %s357, 256
          %s359 = scalar_lea.vmem [#allocation9], %s358
          %361 = vsyncadd %s356, 0
          %s362 = smul.addr %s22, 64
          %s363 = smul.addr %s362, 4
          %s364 = scalar_lea.hbm %s6, %s363
          %s365 = sshll.u32 %s364, 4
          %s366 = int_to_ptr.hbm [resolvable:$true] %s365
          %s367 = sshll.u32 %s359, 4
          %s368 = int_to_ptr.vmem [resolvable:$true] %s367
          %373 = dma.hbm_to_vmem [thread:$0]  %s366, 4096, %s368, %s356, 256, 256, 16
        $region52: #{tpu_custom_call.1} parent=43 // pred_fallthru
          _
        // Predicated region
        $region53: #{tpu_custom_call.1} parent=43 // pred_check
          %p374 = pneg %p199
        $region54: #{tpu_custom_call.1} parent=43 // pred_check_branch
          %376 = sbr.rel (%p374) target = $region56
        $region55: #{tpu_custom_call.1} parent=43 // pred_region
          %p377 = scmp.lt.s32.totalorder %s22, 1
          %s378 = scalar_select %p377, %s22, 1
          %s379 = smul.addr %s378, 4
          %s380 = scalar_lea.vmem %s7, %s379
        $region56: #{tpu_custom_call.1} parent=43 // pred_fallthru
          _
      $region44: #{tpu_custom_call.1} parent=5 // pred_fallthru
        _
      %p381 = scmp.le.s32.totalorder 1, %s22
      %p382 = scmp.lt.s32.totalorder %s22, 3
      %p383 = pnand %p381, %p382
      %p384 = pneg %p383
      // Predicated region
      $region57: #{tpu_custom_call.1} parent=5 // pred_check
        _
      $region58: #{tpu_custom_call.1} parent=5 // pred_check_branch
        %386 = sbr.rel (%p383) target = $region60
      $region59: #{tpu_custom_call.1} parent=5 // pred_region
        %s387 = ssub.s32 %s22, 1
        // Predicated region
        $region61: #{tpu_custom_call.1} parent=59 // pred_check
          %p388 = pneg %p106
        $region62: #{tpu_custom_call.1} parent=59 // pred_check_branch
          %390 = sbr.rel (%p388) target = $region64
        $region63: #{tpu_custom_call.1} parent=59 // pred_region
          %392 = dma.done [#allocation5], 1024
        $region64: #{tpu_custom_call.1} parent=59 // pred_fallthru
          _
        %s393 = sand.u32 %s27, 1
        %s394 = scalar_lea.sflag [#allocation8], %s393
        %s395 = sand.u32 %s140, 1
        %s396 = smul.addr %s395, 256
        %s397 = scalar_lea.vmem [#allocation7], %s396
        // Predicated region
        $region65: #{tpu_custom_call.1} parent=59 // pred_check
          %p398 = pneg %p153
        $region66: #{tpu_custom_call.1} parent=59 // pred_check_branch
          %400 = sbr.rel (%p398) target = $region68
        $region67: #{tpu_custom_call.1} parent=59 // pred_region
          %402 = dma.done %s394, 4096
        $region68: #{tpu_custom_call.1} parent=59 // pred_fallthru
          _
        %s403 = sand.u32 %s27, 1
        %s404 = scalar_lea.sflag [#allocation8], %s403
        %s405 = sand.u32 %s166, 1
        %s406 = smul.addr %s405, 256
        %s407 = scalar_lea.vmem [#allocation9], %s406
        // Predicated region
        $region69: #{tpu_custom_call.1} parent=59 // pred_check
          %p408 = pneg %p179
        $region70: #{tpu_custom_call.1} parent=59 // pred_check_branch
          %410 = sbr.rel (%p408) target = $region72
        $region71: #{tpu_custom_call.1} parent=59 // pred_region
          %412 = dma.done %s404, 4096
        $region72: #{tpu_custom_call.1} parent=59 // pred_fallthru
          _
        // Predicated region
        $region73: #{tpu_custom_call.1} parent=59 // pred_check
          %p413 = pneg %p226
        $region74: #{tpu_custom_call.1} parent=59 // pred_check_branch
          %415 = sbr.rel (%p413) target = $region76
        $region75: #{tpu_custom_call.1} parent=59 // pred_region
          %417 = dma.done [#allocation11], 1024
        $region76: #{tpu_custom_call.1} parent=59 // pred_fallthru
          _
        %p418 = pneg %p43
        %p419 = pneg %p40
        %p420 = pneg %p64
        %p421 = pneg %p61
        %p422 = pneg %p85
        %p423 = pneg %p82
        %p424 = pneg %p106
        %p425 = pneg %p103
        %p426 = pneg %p127
        %p427 = pneg %p124
        %s428 = sand.u32 %s27, 1
        %s429 = scalar_lea.sflag [#allocation8], %s428
        %s430 = sand.u32 %s140, 1
        %s431 = smul.addr %s430, 256
        %s432 = scalar_lea.vmem [#allocation7], %s431
        %p433 = pneg %p153
        %p434 = pneg %p150
        %s435 = sand.u32 %s27, 1
        %s436 = scalar_lea.sflag [#allocation8], %s435
        %s437 = sand.u32 %s166, 1
        %s438 = smul.addr %s437, 256
        %s439 = scalar_lea.vmem [#allocation9], %s438
        %p440 = pneg %p179
        %p441 = pneg %p176
        %p442 = scmp.lt.s32.totalorder %s27, 1
        %s443 = scalar_select %p442, %s27, 1
        %s444 = smul.addr %s443, 4
        %s445 = scalar_lea.vmem %s7, %s444
        %p446 = pneg %p205
        %p447 = pneg %p202
        %p448 = pneg %p226
        %p449 = pneg %p223
        %p450 = pneg %p247
        %p451 = pneg %p244
        %p452 = pneg %p268
        %p453 = pneg %p265
        %p454 = scmp.lt.s32.totalorder %s27, 1
        %s455 = scalar_select %p454, %s27, 1
        %s456 = smul.addr %s455, 4
        %s457 = scalar_lea.vmem %s7, %s456
        %p459 = scmp.eq.s32.totalorder %s27, 0
        // Predicated region
        $region77: #{tpu_custom_call.1} parent=59 // pred_check
          %p460 = pneg %p459
        $region78: #{tpu_custom_call.1} parent=59 // pred_check_branch
          %462 = sbr.rel (%p460) target = $region80
        $region79: #{tpu_custom_call.1} parent=59 // pred_region
          %v463 = vld [vmem:[%s0] sm:$0xf]
          %v464 = vld [vmem:[%s0 + $0x4] sm:$0xf]
          %v465 = vld [vmem:[%s0 + $0x8] sm:$0xf]
          %v466 = vld [vmem:[%s0 + $0xc] sm:$0xf]
          %v467 = vld [vmem:[%s0 + $0x10] sm:$0xf]
          %v468 = vld [vmem:[%s0 + $0x14] sm:$0xf]
          %v469 = vld [vmem:[%s0 + $0x18] sm:$0xf]
          %v470 = vld [vmem:[%s0 + $0x1c] sm:$0xf]
          %v471 = vld [vmem:[%s1] sm:$0xf]
          %v472 = vld [vmem:[%s2] sm:$0x1]
          %v474 = vperm.slane %v472, 0
          %v484 = vunpack.c.l.b16 %v463
          %v485 = vunpack.c.l.b16 %v464
          %v486 = vunpack.c.l.b16 %v465
          %v487 = vunpack.c.l.b16 %v466
          %v488 = vunpack.c.l.b16 %v467
          %v489 = vunpack.c.l.b16 %v468
          %v490 = vunpack.c.l.b16 %v469
          %v491 = vunpack.c.l.b16 %v470
          %v492 = vpack.c.b16 %v485, %v484
          %v493 = vpack.c.b16 %v487, %v486
          %v494 = vpack.c.b16 %v489, %v488
          %v495 = vpack.c.b16 %v491, %v490
          %vm496 = vcmask 64512
          %v498 = vsel %vm496, %v492, 0
          %v501 = vsel %vm496, %v493, 0
          %v504 = vsel %vm496, %v494, 0
          %v507 = vsel %vm496, %v495, 0
          %vm509 = vcmask 1043456
          %v511 = vsel %vm509, %v471, 0
          %513 = vmatpush.bf16.msra.mxu0 0
          %514 = vmatpush.bf16.msra.mxu0 0
          %515 = vmatpush.bf16.msra.mxu0 0
          %516 = vmatpush.bf16.msra.mxu0 0
          %517 = vmatpush.bf16.msra.mxu0 0
          %518 = vmatpush.bf16.msra.mxu0 0
          %519 = vmatpush.bf16.msra.mxu0 0
          %520 = vmatpush.bf16.msra.mxu0 %v511
          %521 = vmatmul.bf16.gmra.mxu0 %v498
          %v522 = vpop.f32.mrf.mxu0
          %v523 = vadd.f32 %v474, %v522
          %v524 = vpop.f32.mrf.mxu0
          %v525 = vadd.f32 %v474, %v524
          %526 = vmatmul.bf16.gmra.mxu0 %v501
          %v527 = vpop.f32.mrf.mxu0
          %v528 = vadd.f32 %v474, %v527
          %v529 = vpop.f32.mrf.mxu0
          %v530 = vadd.f32 %v474, %v529
          %531 = vmatmul.bf16.gmra.mxu0 %v504
          %v532 = vpop.f32.mrf.mxu0
          %v533 = vadd.f32 %v474, %v532
          %v534 = vpop.f32.mrf.mxu0
          %v535 = vadd.f32 %v474, %v534
          %536 = vmatmul.bf16.gmra.mxu0 %v507
          %v537 = vpop.f32.mrf.mxu0
          %v538 = vadd.f32 %v474, %v537
          %v539 = vpop.f32.mrf.mxu0
          %v540 = vadd.f32 %v474, %v539
          %541 = vdwg.mxu0
          %v542 = vmax.f32 %v523, 0.0
          %v543 = vmax.f32 %v525, 0.0
          %v544 = vmax.f32 %v528, 0.0
          %v545 = vmax.f32 %v530, 0.0
          %v546 = vmax.f32 %v533, 0.0
          %v547 = vmax.f32 %v535, 0.0
          %v548 = vmax.f32 %v538, 0.0
          %v549 = vmax.f32 %v540, 0.0
          %v550 = vpack.c.bf16 %v543, %v542
          %v551 = vpack.c.bf16 %v545, %v544
          %v552 = vpack.c.bf16 %v547, %v546
          %v553 = vpack.c.bf16 %v549, %v548
          %v554 = vld [vmem:[#allocation4] sm:$0xf]
          %v555 = vld [vmem:[#allocation4 + $0x4] sm:$0xf]
          %v556 = vld [vmem:[#allocation4 + $0x8] sm:$0xf]
          %v557 = vld [vmem:[#allocation4 + $0xc] sm:$0xf]
          %v558 = vld [vmem:[#allocation4 + $0x10] sm:$0xf]
          %v559 = vld [vmem:[#allocation4 + $0x14] sm:$0xf]
          %v560 = vld [vmem:[#allocation4 + $0x18] sm:$0xf]
          %v561 = vld [vmem:[#allocation4 + $0x1c] sm:$0xf]
          %v562 = vld [vmem:[#allocation4 + $0x20] sm:$0xf]
          %v563 = vld [vmem:[#allocation4 + $0x24] sm:$0xf]
          %v564 = vld [vmem:[#allocation4 + $0x28] sm:$0xf]
          %v565 = vld [vmem:[#allocation4 + $0x2c] sm:$0xf]
          %v566 = vld [vmem:[#allocation4 + $0x30] sm:$0xf]
          %v567 = vld [vmem:[#allocation4 + $0x34] sm:$0xf]
          %v568 = vld [vmem:[#allocation4 + $0x38] sm:$0xf]
          %v569 = vld [vmem:[#allocation4 + $0x3c] sm:$0xf]
          %v570 = vld [vmem:[%s4] sm:$0x1]
          %v572 = vperm.slane %v570, 0
          %v590 = vunpack.c.l.b16 %v554
          %v591 = vunpack.c.l.b16 %v555
          %v592 = vunpack.c.l.b16 %v556
          %v593 = vunpack.c.l.b16 %v557
          %v594 = vunpack.c.l.b16 %v558
          %v595 = vunpack.c.l.b16 %v559
          %v596 = vunpack.c.l.b16 %v560
          %v597 = vunpack.c.l.b16 %v561
          %v598 = vunpack.c.l.b16 %v562
          %v599 = vunpack.c.l.b16 %v563
          %v600 = vunpack.c.l.b16 %v564
          %v601 = vunpack.c.l.b16 %v565
          %v602 = vunpack.c.l.b16 %v566
          %v603 = vunpack.c.l.b16 %v567
          %v604 = vunpack.c.l.b16 %v568
          %v605 = vunpack.c.l.b16 %v569
          %v606 = vpack.c.b16 %v591, %v590
          %v607 = vpack.c.b16 %v593, %v592
          %v608 = vpack.c.b16 %v595, %v594
          %v609 = vpack.c.b16 %v597, %v596
          %v610 = vpack.c.b16 %v599, %v598
          %v611 = vpack.c.b16 %v601, %v600
          %v612 = vpack.c.b16 %v603, %v602
          %v613 = vpack.c.b16 %v605, %v604
          %622 = vmatpush.bf16.msra.mxu0 %v613
          %623 = vmatpush.bf16.msra.mxu0 %v612
          %624 = vmatpush.bf16.msra.mxu0 %v611
          %625 = vmatpush.bf16.msra.mxu0 %v610
          %626 = vmatpush.bf16.msra.mxu0 %v609
          %627 = vmatpush.bf16.msra.mxu0 %v608
          %628 = vmatpush.bf16.msra.mxu0 %v607
          %629 = vmatpush.bf16.msra.mxu0 %v606
          %630 = vmatmul.bf16.gmra.mxu0 %v550
          %v631 = vpop.f32.mrf.mxu0
          %v632 = vadd.f32 %v572, %v631
          %v633 = vpop.f32.mrf.mxu0
          %v634 = vadd.f32 %v572, %v633
          %635 = vmatmul.bf16.gmra.mxu0 %v551
          %v636 = vpop.f32.mrf.mxu0
          %v637 = vadd.f32 %v572, %v636
          %v638 = vpop.f32.mrf.mxu0
          %v639 = vadd.f32 %v572, %v638
          %640 = vmatmul.bf16.gmra.mxu0 %v552
          %v641 = vpop.f32.mrf.mxu0
          %v642 = vadd.f32 %v572, %v641
          %v643 = vpop.f32.mrf.mxu0
          %v644 = vadd.f32 %v572, %v643
          %645 = vmatmul.bf16.gmra.mxu0 %v553
          %v646 = vpop.f32.mrf.mxu0
          %v647 = vadd.f32 %v572, %v646
          %v648 = vpop.f32.mrf.mxu0
          %v649 = vadd.f32 %v572, %v648
          %650 = vdwg.mxu0
          %651 = vst [vmem:[#allocation2] sm:$0xff] %v632
          %652 = vst [vmem:[#allocation2 + $0x8] sm:$0xff] %v634
          %653 = vst [vmem:[#allocation2 + $0x10] sm:$0xff] %v637
          %654 = vst [vmem:[#allocation2 + $0x18] sm:$0xff] %v639
          %655 = vst [vmem:[#allocation2 + $0x20] sm:$0xff] %v642
          %656 = vst [vmem:[#allocation2 + $0x28] sm:$0xff] %v644
          %657 = vst [vmem:[#allocation2 + $0x30] sm:$0xff] %v647
          %658 = vst [vmem:[#allocation2 + $0x38] sm:$0xff] %v649
        $region80: #{tpu_custom_call.1} parent=59 // pred_fallthru
          _
        %v659 = vld [vmem:[#allocation2] sm:$0xff]
        %v660 = vld [vmem:[#allocation2 + $0x8] sm:$0xff]
        %v661 = vld [vmem:[#allocation2 + $0x10] sm:$0xff]
        %v662 = vld [vmem:[#allocation2 + $0x18] sm:$0xff]
        %v663 = vld [vmem:[#allocation2 + $0x20] sm:$0xff]
        %v664 = vld [vmem:[#allocation2 + $0x28] sm:$0xff]
        %v665 = vld [vmem:[#allocation2 + $0x30] sm:$0xff]
        %v666 = vld [vmem:[#allocation2 + $0x38] sm:$0xff]
        %v667 = vpack.c.bf16 %v660, %v659
        %v668 = vpack.c.bf16 %v662, %v661
        %v669 = vpack.c.bf16 %v664, %v663
        %v670 = vpack.c.bf16 %v666, %v665
        %v671 = vld [vmem:[%s397] sm:$0xff]
        %v672 = vld [vmem:[%s397 + $0x8] sm:$0xff]
        %v673 = vld [vmem:[%s397 + $0x10] sm:$0xff]
        %v674 = vld [vmem:[%s397 + $0x18] sm:$0xff]
        %v675 = vld [vmem:[%s397 + $0x20] sm:$0xff]
        %v676 = vld [vmem:[%s397 + $0x28] sm:$0xff]
        %v677 = vld [vmem:[%s397 + $0x30] sm:$0xff]
        %v678 = vld [vmem:[%s397 + $0x38] sm:$0xff]
        %v679 = vld [vmem:[%s397 + $0x40] sm:$0xff]
        %v680 = vld [vmem:[%s397 + $0x48] sm:$0xff]
        %v681 = vld [vmem:[%s397 + $0x50] sm:$0xff]
        %v682 = vld [vmem:[%s397 + $0x58] sm:$0xff]
        %v683 = vld [vmem:[%s397 + $0x60] sm:$0xff]
        %v684 = vld [vmem:[%s397 + $0x68] sm:$0xff]
        %v685 = vld [vmem:[%s397 + $0x70] sm:$0xff]
        %v686 = vld [vmem:[%s397 + $0x78] sm:$0xff]
        %v687 = vld [vmem:[%s397 + $0x80] sm:$0xff]
        %v688 = vld [vmem:[%s397 + $0x88] sm:$0xff]
        %v689 = vld [vmem:[%s397 + $0x90] sm:$0xff]
        %v690 = vld [vmem:[%s397 + $0x98] sm:$0xff]
        %v691 = vld [vmem:[%s397 + $0xa0] sm:$0xff]
        %v692 = vld [vmem:[%s397 + $0xa8] sm:$0xff]
        %v693 = vld [vmem:[%s397 + $0xb0] sm:$0xff]
        %v694 = vld [vmem:[%s397 + $0xb8] sm:$0xff]
        %v695 = vld [vmem:[%s397 + $0xc0] sm:$0xff]
        %v696 = vld [vmem:[%s397 + $0xc8] sm:$0xff]
        %v697 = vld [vmem:[%s397 + $0xd0] sm:$0xff]
        %v698 = vld [vmem:[%s397 + $0xd8] sm:$0xff]
        %v699 = vld [vmem:[%s397 + $0xe0] sm:$0xff]
        %v700 = vld [vmem:[%s397 + $0xe8] sm:$0xff]
        %v701 = vld [vmem:[%s397 + $0xf0] sm:$0xff]
        %v702 = vld [vmem:[%s397 + $0xf8] sm:$0xff]
        %v703 = vld [vmem:[%s457] sm:$0xf]
        %v705 = vperm.slane %v703, 0
        %v706 = vperm.slane %v703, 1
        %v707 = vperm.slane %v703, 2
        %v708 = vperm.slane %v703, 3
        %v745 = vunpack.c.l.b16 %v671
        %v746 = vunpack.c.h.b16 %v671
        %v747 = vunpack.c.l.b16 %v672
        %v748 = vunpack.c.h.b16 %v672
        %v749 = vunpack.c.l.b16 %v673
        %v750 = vunpack.c.h.b16 %v673
        %v751 = vunpack.c.l.b16 %v674
        %v752 = vunpack.c.h.b16 %v674
        %v753 = vunpack.c.l.b16 %v675
        %v754 = vunpack.c.h.b16 %v675
        %v755 = vunpack.c.l.b16 %v676
        %v756 = vunpack.c.h.b16 %v676
        %v757 = vunpack.c.l.b16 %v677
        %v758 = vunpack.c.h.b16 %v677
        %v759 = vunpack.c.l.b16 %v678
        %v760 = vunpack.c.h.b16 %v678
        %v761 = vunpack.c.l.b16 %v679
        %v762 = vunpack.c.h.b16 %v679
        %v763 = vunpack.c.l.b16 %v680
        %v764 = vunpack.c.h.b16 %v680
        %v765 = vunpack.c.l.b16 %v681
        %v766 = vunpack.c.h.b16 %v681
        %v767 = vunpack.c.l.b16 %v682
        %v768 = vunpack.c.h.b16 %v682
        %v769 = vunpack.c.l.b16 %v683
        %v770 = vunpack.c.h.b16 %v683
        %v771 = vunpack.c.l.b16 %v684
        %v772 = vunpack.c.h.b16 %v684
        %v773 = vunpack.c.l.b16 %v685
        %v774 = vunpack.c.h.b16 %v685
        %v775 = vunpack.c.l.b16 %v686
        %v776 = vunpack.c.h.b16 %v686
        %v777 = vunpack.c.l.b16 %v687
        %v778 = vunpack.c.h.b16 %v687
        %v779 = vunpack.c.l.b16 %v688
        %v780 = vunpack.c.h.b16 %v688
        %v781 = vunpack.c.l.b16 %v689
        %v782 = vunpack.c.h.b16 %v689
        %v783 = vunpack.c.l.b16 %v690
        %v784 = vunpack.c.h.b16 %v690
        %v785 = vunpack.c.l.b16 %v691
        %v786 = vunpack.c.h.b16 %v691
        %v787 = vunpack.c.l.b16 %v692
        %v788 = vunpack.c.h.b16 %v692
        %v789 = vunpack.c.l.b16 %v693
        %v790 = vunpack.c.h.b16 %v693
        %v791 = vunpack.c.l.b16 %v694
        %v792 = vunpack.c.h.b16 %v694
        %v793 = vunpack.c.l.b16 %v695
        %v794 = vunpack.c.h.b16 %v695
        %v795 = vunpack.c.l.b16 %v696
        %v796 = vunpack.c.h.b16 %v696
        %v797 = vunpack.c.l.b16 %v697
        %v798 = vunpack.c.h.b16 %v697
        %v799 = vunpack.c.l.b16 %v698
        %v800 = vunpack.c.h.b16 %v698
        %v801 = vunpack.c.l.b16 %v699
        %v802 = vunpack.c.h.b16 %v699
        %v803 = vunpack.c.l.b16 %v700
        %v804 = vunpack.c.h.b16 %v700
        %v805 = vunpack.c.l.b16 %v701
        %v806 = vunpack.c.h.b16 %v701
        %v807 = vunpack.c.l.b16 %v702
        %v808 = vunpack.c.h.b16 %v702
        %v809 = vpack.c.b16 %v749, %v745
        %v810 = vpack.c.b16 %v750, %v746
        %v811 = vpack.c.b16 %v751, %v747
        %v812 = vpack.c.b16 %v752, %v748
        %v813 = vpack.c.b16 %v757, %v753
        %v814 = vpack.c.b16 %v758, %v754
        %v815 = vpack.c.b16 %v759, %v755
        %v816 = vpack.c.b16 %v760, %v756
        %v817 = vpack.c.b16 %v765, %v761
        %v818 = vpack.c.b16 %v766, %v762
        %v819 = vpack.c.b16 %v767, %v763
        %v820 = vpack.c.b16 %v768, %v764
        %v821 = vpack.c.b16 %v773, %v769
        %v822 = vpack.c.b16 %v774, %v770
        %v823 = vpack.c.b16 %v775, %v771
        %v824 = vpack.c.b16 %v776, %v772
        %v825 = vpack.c.b16 %v781, %v777
        %v826 = vpack.c.b16 %v782, %v778
        %v827 = vpack.c.b16 %v783, %v779
        %v828 = vpack.c.b16 %v784, %v780
        %v829 = vpack.c.b16 %v789, %v785
        %v830 = vpack.c.b16 %v790, %v786
        %v831 = vpack.c.b16 %v791, %v787
        %v832 = vpack.c.b16 %v792, %v788
        %v833 = vpack.c.b16 %v797, %v793
        %v834 = vpack.c.b16 %v798, %v794
        %v835 = vpack.c.b16 %v799, %v795
        %v836 = vpack.c.b16 %v800, %v796
        %v837 = vpack.c.b16 %v805, %v801
        %v838 = vpack.c.b16 %v806, %v802
        %v839 = vpack.c.b16 %v807, %v803
        %v840 = vpack.c.b16 %v808, %v804
        %873 = vmatpush.bf16.msra.mxu0 %v837
        %874 = vmatpush.bf16.msra.mxu0 %v833
        %875 = vmatpush.bf16.msra.mxu0 %v829
        %876 = vmatpush.bf16.msra.mxu0 %v825
        %877 = vmatpush.bf16.msra.mxu0 %v821
        %878 = vmatpush.bf16.msra.mxu0 %v817
        %879 = vmatpush.bf16.msra.mxu0 %v813
        %880 = vmatpush.bf16.msra.mxu0 %v809
        %881 = vmatmul.bf16.gmra.mxu0 %v667
        %v882 = vpop.f32.mrf.mxu0
        %v883 = vadd.f32 %v705, %v882
        %v884 = vpop.f32.mrf.mxu0
        %v885 = vadd.f32 %v705, %v884
        %886 = vmatmul.bf16.gmra.mxu0 %v668
        %v887 = vpop.f32.mrf.mxu0
        %v888 = vadd.f32 %v705, %v887
        %v889 = vpop.f32.mrf.mxu0
        %v890 = vadd.f32 %v705, %v889
        %891 = vmatmul.bf16.gmra.mxu0 %v669
        %v892 = vpop.f32.mrf.mxu0
        %v893 = vadd.f32 %v705, %v892
        %v894 = vpop.f32.mrf.mxu0
        %v895 = vadd.f32 %v705, %v894
        %896 = vmatmul.bf16.gmra.mxu0 %v670
        %v897 = vpop.f32.mrf.mxu0
        %v898 = vadd.f32 %v705, %v897
        %v899 = vpop.f32.mrf.mxu0
        %v900 = vadd.f32 %v705, %v899
        %901 = vdwg.mxu0
        %902 = vmatpush.bf16.msra.mxu0 %v838
        %903 = vmatpush.bf16.msra.mxu0 %v834
        %904 = vmatpush.bf16.msra.mxu0 %v830
        %905 = vmatpush.bf16.msra.mxu0 %v826
        %906 = vmatpush.bf16.msra.mxu0 %v822
        %907 = vmatpush.bf16.msra.mxu0 %v818
        %908 = vmatpush.bf16.msra.mxu0 %v814
        %909 = vmatpush.bf16.msra.mxu0 %v810
        %910 = vmatmul.bf16.gmra.mxu0 %v667
        %v911 = vpop.f32.mrf.mxu0
        %v912 = vadd.f32 %v706, %v911
        %v913 = vpop.f32.mrf.mxu0
        %v914 = vadd.f32 %v706, %v913
        %915 = vmatmul.bf16.gmra.mxu0 %v668
        %v916 = vpop.f32.mrf.mxu0
        %v917 = vadd.f32 %v706, %v916
        %v918 = vpop.f32.mrf.mxu0
        %v919 = vadd.f32 %v706, %v918
        %920 = vmatmul.bf16.gmra.mxu0 %v669
        %v921 = vpop.f32.mrf.mxu0
        %v922 = vadd.f32 %v706, %v921
        %v923 = vpop.f32.mrf.mxu0
        %v924 = vadd.f32 %v706, %v923
        %925 = vmatmul.bf16.gmra.mxu0 %v670
        %v926 = vpop.f32.mrf.mxu0
        %v927 = vadd.f32 %v706, %v926
        %v928 = vpop.f32.mrf.mxu0
        %v929 = vadd.f32 %v706, %v928
        %930 = vdwg.mxu0
        %931 = vmatpush.bf16.msra.mxu0 %v839
        %932 = vmatpush.bf16.msra.mxu0 %v835
        %933 = vmatpush.bf16.msra.mxu0 %v831
        %934 = vmatpush.bf16.msra.mxu0 %v827
        %935 = vmatpush.bf16.msra.mxu0 %v823
        %936 = vmatpush.bf16.msra.mxu0 %v819
        %937 = vmatpush.bf16.msra.mxu0 %v815
        %938 = vmatpush.bf16.msra.mxu0 %v811
        %939 = vmatmul.bf16.gmra.mxu0 %v667
        %v940 = vpop.f32.mrf.mxu0
        %v941 = vadd.f32 %v707, %v940
        %v942 = vpop.f32.mrf.mxu0
        %v943 = vadd.f32 %v707, %v942
        %944 = vmatmul.bf16.gmra.mxu0 %v668
        %v945 = vpop.f32.mrf.mxu0
        %v946 = vadd.f32 %v707, %v945
        %v947 = vpop.f32.mrf.mxu0
        %v948 = vadd.f32 %v707, %v947
        %949 = vmatmul.bf16.gmra.mxu0 %v669
        %v950 = vpop.f32.mrf.mxu0
        %v951 = vadd.f32 %v707, %v950
        %v952 = vpop.f32.mrf.mxu0
        %v953 = vadd.f32 %v707, %v952
        %954 = vmatmul.bf16.gmra.mxu0 %v670
        %v955 = vpop.f32.mrf.mxu0
        %v956 = vadd.f32 %v707, %v955
        %v957 = vpop.f32.mrf.mxu0
        %v958 = vadd.f32 %v707, %v957
        %959 = vdwg.mxu0
        %960 = vmatpush.bf16.msra.mxu0 %v840
        %961 = vmatpush.bf16.msra.mxu0 %v836
        %962 = vmatpush.bf16.msra.mxu0 %v832
        %963 = vmatpush.bf16.msra.mxu0 %v828
        %964 = vmatpush.bf16.msra.mxu0 %v824
        %965 = vmatpush.bf16.msra.mxu0 %v820
        %966 = vmatpush.bf16.msra.mxu0 %v816
        %967 = vmatpush.bf16.msra.mxu0 %v812
        %968 = vmatmul.bf16.gmra.mxu0 %v667
        %v969 = vpop.f32.mrf.mxu0
        %v970 = vadd.f32 %v708, %v969
        %v971 = vpop.f32.mrf.mxu0
        %v972 = vadd.f32 %v708, %v971
        %973 = vmatmul.bf16.gmra.mxu0 %v668
        %v974 = vpop.f32.mrf.mxu0
        %v975 = vadd.f32 %v708, %v974
        %v976 = vpop.f32.mrf.mxu0
        %v977 = vadd.f32 %v708, %v976
        %978 = vmatmul.bf16.gmra.mxu0 %v669
        %v979 = vpop.f32.mrf.mxu0
        %v980 = vadd.f32 %v708, %v979
        %v981 = vpop.f32.mrf.mxu0
        %v982 = vadd.f32 %v708, %v981
        %983 = vmatmul.bf16.gmra.mxu0 %v670
        %v984 = vpop.f32.mrf.mxu0
        %v985 = vadd.f32 %v708, %v984
        %v986 = vpop.f32.mrf.mxu0
        %v987 = vadd.f32 %v708, %v986
        %988 = vdwg.mxu0
        %989 = vst [vmem:[#allocation3] sm:$0xff] %v883
        %990 = vst [vmem:[#allocation3 + $0x8] sm:$0xff] %v912
        %991 = vst [vmem:[#allocation3 + $0x10] sm:$0xff] %v941
        %992 = vst [vmem:[#allocation3 + $0x18] sm:$0xff] %v970
        %993 = vst [vmem:[#allocation3 + $0x20] sm:$0xff] %v885
        %994 = vst [vmem:[#allocation3 + $0x28] sm:$0xff] %v914
        %995 = vst [vmem:[#allocation3 + $0x30] sm:$0xff] %v943
        %996 = vst [vmem:[#allocation3 + $0x38] sm:$0xff] %v972
        %997 = vst [vmem:[#allocation3 + $0x40] sm:$0xff] %v888
        %998 = vst [vmem:[#allocation3 + $0x48] sm:$0xff] %v917
        %999 = vst [vmem:[#allocation3 + $0x50] sm:$0xff] %v946
        %1000 = vst [vmem:[#allocation3 + $0x58] sm:$0xff] %v975
        %1001 = vst [vmem:[#allocation3 + $0x60] sm:$0xff] %v890
        %1002 = vst [vmem:[#allocation3 + $0x68] sm:$0xff] %v919
        %1003 = vst [vmem:[#allocation3 + $0x70] sm:$0xff] %v948
        %1004 = vst [vmem:[#allocation3 + $0x78] sm:$0xff] %v977
        %1005 = vst [vmem:[#allocation3 + $0x80] sm:$0xff] %v893
        %1006 = vst [vmem:[#allocation3 + $0x88] sm:$0xff] %v922
        %1007 = vst [vmem:[#allocation3 + $0x90] sm:$0xff] %v951
        %1008 = vst [vmem:[#allocation3 + $0x98] sm:$0xff] %v980
        %1009 = vst [vmem:[#allocation3 + $0xa0] sm:$0xff] %v895
        %1010 = vst [vmem:[#allocation3 + $0xa8] sm:$0xff] %v924
        %1011 = vst [vmem:[#allocation3 + $0xb0] sm:$0xff] %v953
        %1012 = vst [vmem:[#allocation3 + $0xb8] sm:$0xff] %v982
        %1013 = vst [vmem:[#allocation3 + $0xc0] sm:$0xff] %v898
        %1014 = vst [vmem:[#allocation3 + $0xc8] sm:$0xff] %v927
        %1015 = vst [vmem:[#allocation3 + $0xd0] sm:$0xff] %v956
        %1016 = vst [vmem:[#allocation3 + $0xd8] sm:$0xff] %v985
        %1017 = vst [vmem:[#allocation3 + $0xe0] sm:$0xff] %v900
        %1018 = vst [vmem:[#allocation3 + $0xe8] sm:$0xff] %v929
        %1019 = vst [vmem:[#allocation3 + $0xf0] sm:$0xff] %v958
        %1020 = vst [vmem:[#allocation3 + $0xf8] sm:$0xff] %v987
        %v1021 = vld [vmem:[%s407] sm:$0xff]
        %v1022 = vld [vmem:[%s407 + $0x8] sm:$0xff]
        %v1023 = vld [vmem:[%s407 + $0x10] sm:$0xff]
        %v1024 = vld [vmem:[%s407 + $0x18] sm:$0xff]
        %v1025 = vld [vmem:[%s407 + $0x20] sm:$0xff]
        %v1026 = vld [vmem:[%s407 + $0x28] sm:$0xff]
        %v1027 = vld [vmem:[%s407 + $0x30] sm:$0xff]
        %v1028 = vld [vmem:[%s407 + $0x38] sm:$0xff]
        %v1029 = vld [vmem:[%s407 + $0x40] sm:$0xff]
        %v1030 = vld [vmem:[%s407 + $0x48] sm:$0xff]
        %v1031 = vld [vmem:[%s407 + $0x50] sm:$0xff]
        %v1032 = vld [vmem:[%s407 + $0x58] sm:$0xff]
        %v1033 = vld [vmem:[%s407 + $0x60] sm:$0xff]
        %v1034 = vld [vmem:[%s407 + $0x68] sm:$0xff]
        %v1035 = vld [vmem:[%s407 + $0x70] sm:$0xff]
        %v1036 = vld [vmem:[%s407 + $0x78] sm:$0xff]
        %v1037 = vld [vmem:[%s407 + $0x80] sm:$0xff]
        %v1038 = vld [vmem:[%s407 + $0x88] sm:$0xff]
        %v1039 = vld [vmem:[%s407 + $0x90] sm:$0xff]
        %v1040 = vld [vmem:[%s407 + $0x98] sm:$0xff]
        %v1041 = vld [vmem:[%s407 + $0xa0] sm:$0xff]
        %v1042 = vld [vmem:[%s407 + $0xa8] sm:$0xff]
        %v1043 = vld [vmem:[%s407 + $0xb0] sm:$0xff]
        %v1044 = vld [vmem:[%s407 + $0xb8] sm:$0xff]
        %v1045 = vld [vmem:[%s407 + $0xc0] sm:$0xff]
        %v1046 = vld [vmem:[%s407 + $0xc8] sm:$0xff]
        %v1047 = vld [vmem:[%s407 + $0xd0] sm:$0xff]
        %v1048 = vld [vmem:[%s407 + $0xd8] sm:$0xff]
        %v1049 = vld [vmem:[%s407 + $0xe0] sm:$0xff]
        %v1050 = vld [vmem:[%s407 + $0xe8] sm:$0xff]
        %v1051 = vld [vmem:[%s407 + $0xf0] sm:$0xff]
        %v1052 = vld [vmem:[%s407 + $0xf8] sm:$0xff]
        %v1053 = vld [vmem:[#allocation3] sm:$0xff]
        %v1054 = vld [vmem:[#allocation3 + $0x8] sm:$0xff]
        %v1055 = vld [vmem:[#allocation3 + $0x10] sm:$0xff]
        %v1056 = vld [vmem:[#allocation3 + $0x18] sm:$0xff]
        %v1089 = vunpack.c.l.b16 %v1021
        %v1090 = vunpack.c.h.b16 %v1021
        %v1091 = vunpack.c.l.b16 %v1022
        %v1092 = vunpack.c.h.b16 %v1022
        %v1093 = vunpack.c.l.b16 %v1023
        %v1094 = vunpack.c.h.b16 %v1023
        %v1095 = vunpack.c.l.b16 %v1024
        %v1096 = vunpack.c.h.b16 %v1024
        %v1097 = vunpack.c.l.b16 %v1025
        %v1098 = vunpack.c.h.b16 %v1025
        %v1099 = vunpack.c.l.b16 %v1026
        %v1100 = vunpack.c.h.b16 %v1026
        %v1101 = vunpack.c.l.b16 %v1027
        %v1102 = vunpack.c.h.b16 %v1027
        %v1103 = vunpack.c.l.b16 %v1028
        %v1104 = vunpack.c.h.b16 %v1028
        %v1105 = vunpack.c.l.b16 %v1029
        %v1106 = vunpack.c.h.b16 %v1029
        %v1107 = vunpack.c.l.b16 %v1030
        %v1108 = vunpack.c.h.b16 %v1030
        %v1109 = vunpack.c.l.b16 %v1031
        %v1110 = vunpack.c.h.b16 %v1031
        %v1111 = vunpack.c.l.b16 %v1032
        %v1112 = vunpack.c.h.b16 %v1032
        %v1113 = vunpack.c.l.b16 %v1033
        %v1114 = vunpack.c.h.b16 %v1033
        %v1115 = vunpack.c.l.b16 %v1034
        %v1116 = vunpack.c.h.b16 %v1034
        %v1117 = vunpack.c.l.b16 %v1035
        %v1118 = vunpack.c.h.b16 %v1035
        %v1119 = vunpack.c.l.b16 %v1036
        %v1120 = vunpack.c.h.b16 %v1036
        %v1121 = vunpack.c.l.b16 %v1037
        %v1122 = vunpack.c.h.b16 %v1037
        %v1123 = vunpack.c.l.b16 %v1038
        %v1124 = vunpack.c.h.b16 %v1038
        %v1125 = vunpack.c.l.b16 %v1039
        %v1126 = vunpack.c.h.b16 %v1039
        %v1127 = vunpack.c.l.b16 %v1040
        %v1128 = vunpack.c.h.b16 %v1040
        %v1129 = vunpack.c.l.b16 %v1041
        %v1130 = vunpack.c.h.b16 %v1041
        %v1131 = vunpack.c.l.b16 %v1042
        %v1132 = vunpack.c.h.b16 %v1042
        %v1133 = vunpack.c.l.b16 %v1043
        %v1134 = vunpack.c.h.b16 %v1043
        %v1135 = vunpack.c.l.b16 %v1044
        %v1136 = vunpack.c.h.b16 %v1044
        %v1137 = vunpack.c.l.b16 %v1045
        %v1138 = vunpack.c.h.b16 %v1045
        %v1139 = vunpack.c.l.b16 %v1046
        %v1140 = vunpack.c.h.b16 %v1046
        %v1141 = vunpack.c.l.b16 %v1047
        %v1142 = vunpack.c.h.b16 %v1047
        %v1143 = vunpack.c.l.b16 %v1048
        %v1144 = vunpack.c.h.b16 %v1048
        %v1145 = vunpack.c.l.b16 %v1049
        %v1146 = vunpack.c.h.b16 %v1049
        %v1147 = vunpack.c.l.b16 %v1050
        %v1148 = vunpack.c.h.b16 %v1050
        %v1149 = vunpack.c.l.b16 %v1051
        %v1150 = vunpack.c.h.b16 %v1051
        %v1151 = vunpack.c.l.b16 %v1052
        %v1152 = vunpack.c.h.b16 %v1052
        %v1153 = vpack.c.b16 %v1093, %v1089
        %v1154 = vpack.c.b16 %v1094, %v1090
        %v1155 = vpack.c.b16 %v1095, %v1091
        %v1156 = vpack.c.b16 %v1096, %v1092
        %v1157 = vpack.c.b16 %v1101, %v1097
        %v1158 = vpack.c.b16 %v1102, %v1098
        %v1159 = vpack.c.b16 %v1103, %v1099
        %v1160 = vpack.c.b16 %v1104, %v1100
        %v1161 = vpack.c.b16 %v1109, %v1105
        %v1162 = vpack.c.b16 %v1110, %v1106
        %v1163 = vpack.c.b16 %v1111, %v1107
        %v1164 = vpack.c.b16 %v1112, %v1108
        %v1165 = vpack.c.b16 %v1117, %v1113
        %v1166 = vpack.c.b16 %v1118, %v1114
        %v1167 = vpack.c.b16 %v1119, %v1115
        %v1168 = vpack.c.b16 %v1120, %v1116
        %v1169 = vpack.c.b16 %v1125, %v1121
        %v1170 = vpack.c.b16 %v1126, %v1122
        %v1171 = vpack.c.b16 %v1127, %v1123
        %v1172 = vpack.c.b16 %v1128, %v1124
        %v1173 = vpack.c.b16 %v1133, %v1129
        %v1174 = vpack.c.b16 %v1134, %v1130
        %v1175 = vpack.c.b16 %v1135, %v1131
        %v1176 = vpack.c.b16 %v1136, %v1132
        %v1177 = vpack.c.b16 %v1141, %v1137
        %v1178 = vpack.c.b16 %v1142, %v1138
        %v1179 = vpack.c.b16 %v1143, %v1139
        %v1180 = vpack.c.b16 %v1144, %v1140
        %v1181 = vpack.c.b16 %v1149, %v1145
        %v1182 = vpack.c.b16 %v1150, %v1146
        %v1183 = vpack.c.b16 %v1151, %v1147
        %v1184 = vpack.c.b16 %v1152, %v1148
        %1217 = vmatpush.bf16.msra.mxu0 %v1181
        %1218 = vmatpush.bf16.msra.mxu0 %v1177
        %1219 = vmatpush.bf16.msra.mxu0 %v1173
        %1220 = vmatpush.bf16.msra.mxu0 %v1169
        %1221 = vmatpush.bf16.msra.mxu0 %v1165
        %1222 = vmatpush.bf16.msra.mxu0 %v1161
        %1223 = vmatpush.bf16.msra.mxu0 %v1157
        %1224 = vmatpush.bf16.msra.mxu0 %v1153
        %1225 = vmatmul.bf16.gmra.mxu0 0
        %v1226 = vpop.f32.mrf.mxu0
        %v1227 = vadd.f32 0.0, %v1226
        %v1228 = vpop.f32.mrf.mxu0
        %1229 = vdwg.mxu0
        %1230 = vmatpush.bf16.msra.mxu0 %v1182
        %1231 = vmatpush.bf16.msra.mxu0 %v1178
        %1232 = vmatpush.bf16.msra.mxu0 %v1174
        %1233 = vmatpush.bf16.msra.mxu0 %v1170
        %1234 = vmatpush.bf16.msra.mxu0 %v1166
        %1235 = vmatpush.bf16.msra.mxu0 %v1162
        %1236 = vmatpush.bf16.msra.mxu0 %v1158
        %1237 = vmatpush.bf16.msra.mxu0 %v1154
        %1238 = vmatmul.bf16.gmra.mxu0 0
        %v1239 = vpop.f32.mrf.mxu0
        %v1240 = vadd.f32 0.0, %v1239
        %v1241 = vpop.f32.mrf.mxu0
        %1242 = vdwg.mxu0
        %1243 = vmatpush.bf16.msra.mxu0 %v1183
        %1244 = vmatpush.bf16.msra.mxu0 %v1179
        %1245 = vmatpush.bf16.msra.mxu0 %v1175
        %1246 = vmatpush.bf16.msra.mxu0 %v1171
        %1247 = vmatpush.bf16.msra.mxu0 %v1167
        %1248 = vmatpush.bf16.msra.mxu0 %v1163
        %1249 = vmatpush.bf16.msra.mxu0 %v1159
        %1250 = vmatpush.bf16.msra.mxu0 %v1155
        %1251 = vmatmul.bf16.gmra.mxu0 0
        %v1252 = vpop.f32.mrf.mxu0
        %v1253 = vadd.f32 0.0, %v1252
        %v1254 = vpop.f32.mrf.mxu0
        %1255 = vdwg.mxu0
        %1256 = vmatpush.bf16.msra.mxu0 %v1184
        %1257 = vmatpush.bf16.msra.mxu0 %v1180
        %1258 = vmatpush.bf16.msra.mxu0 %v1176
        %1259 = vmatpush.bf16.msra.mxu0 %v1172
        %1260 = vmatpush.bf16.msra.mxu0 %v1168
        %1261 = vmatpush.bf16.msra.mxu0 %v1164
        %1262 = vmatpush.bf16.msra.mxu0 %v1160
        %1263 = vmatpush.bf16.msra.mxu0 %v1156
        %1264 = vmatmul.bf16.gmra.mxu0 0
        %v1265 = vpop.f32.mrf.mxu0
        %v1266 = vadd.f32 0.0, %v1265
        %v1267 = vpop.f32.mrf.mxu0
        %1268 = vdwg.mxu0
        %v1269 = vadd.f32 %v1053, %v1227
        %v1270 = vadd.f32 %v1054, %v1240
        %v1271 = vadd.f32 %v1055, %v1253
        %v1272 = vadd.f32 %v1056, %v1266
        %v1273 = vxor.u32 %v1269, 2147483648
        %v1274 = vmul.f32 %v1273, 1.442695
        %v1275 = vpow.pop %v1274
        %v1276 = vadd.f32 %v1275, 1.0
        %v1277 = vrcp.pop %v1276
        %v1278 = vmul.f32 %v1276, %v1277
        %v1279 = vsub.f32 1.0, %v1278
        %v1280 = vmul.f32 %v1277, %v1279
        %v1281 = vadd.f32 %v1277, %v1280
        %vm1282 = vweird.f32 %v1276
        %vm1283 = vweird.f32 %v1277
        %vm1284 = vmor %vm1282, %vm1283
        %v1285 = vsel %vm1284, %v1277, %v1281
        %v1286 = vand.u32 2147483647, %v1276
        %vm1287 = vcmp.eq.f32.partialorder %v1286, 8.507059e+37
        %v1288 = vand.u32 %v1276, 2147483648
        %v1289 = vor.u32 1.1754944e-38, %v1288
        %v1290 = vsel %vm1287, %v1289, %v1285
        %v1291 = vmul.f32 1.0, %v1290
        %v1292 = vxor.u32 %v1270, 2147483648
        %v1293 = vmul.f32 %v1292, 1.442695
        %v1294 = vpow.pop %v1293
        %v1295 = vadd.f32 %v1294, 1.0
        %v1296 = vrcp.pop %v1295
        %v1297 = vmul.f32 %v1295, %v1296
        %v1298 = vsub.f32 1.0, %v1297
        %v1299 = vmul.f32 %v1296, %v1298
        %v1300 = vadd.f32 %v1296, %v1299
        %vm1301 = vweird.f32 %v1295
        %vm1302 = vweird.f32 %v1296
        %vm1303 = vmor %vm1301, %vm1302
        %v1304 = vsel %vm1303, %v1296, %v1300
        %v1305 = vand.u32 2147483647, %v1295
        %vm1306 = vcmp.eq.f32.partialorder %v1305, 8.507059e+37
        %v1307 = vand.u32 %v1295, 2147483648
        %v1308 = vor.u32 1.1754944e-38, %v1307
        %v1309 = vsel %vm1306, %v1308, %v1304
        %v1310 = vmul.f32 1.0, %v1309
        %v1311 = vtanh.pop %v1271
        %v1312 = vxor.u32 %v1272, 2147483648
        %v1313 = vmul.f32 %v1312, 1.442695
        %v1314 = vpow.pop %v1313
        %v1315 = vadd.f32 %v1314, 1.0
        %v1316 = vrcp.pop %v1315
        %v1317 = vmul.f32 %v1315, %v1316
        %v1318 = vsub.f32 1.0, %v1317
        %v1319 = vmul.f32 %v1316, %v1318
        %v1320 = vadd.f32 %v1316, %v1319
        %vm1321 = vweird.f32 %v1315
        %vm1322 = vweird.f32 %v1316
        %vm1323 = vmor %vm1321, %vm1322
        %v1324 = vsel %vm1323, %v1316, %v1320
        %v1325 = vand.u32 2147483647, %v1315
        %vm1326 = vcmp.eq.f32.partialorder %v1325, 8.507059e+37
        %v1327 = vand.u32 %v1315, 2147483648
        %v1328 = vor.u32 1.1754944e-38, %v1327
        %v1329 = vsel %vm1326, %v1328, %v1324
        %v1330 = vmul.f32 1.0, %v1329
        %v1331 = vmul.f32 %v1310, 0.0
        %v1332 = vmul.f32 %v1291, %v1311
        %v1333 = vadd.f32 %v1331, %v1332
        %v1334 = vtanh.pop %v1333
        %v1335 = vmul.f32 %v1330, %v1334
        %1336 = vst [vmem:[#allocation2] sm:$0xff] %v1335
        %v1337 = vld [vmem:[#allocation3 + $0x20] sm:$0xff]
        %v1338 = vld [vmem:[#allocation3 + $0x28] sm:$0xff]
        %v1339 = vld [vmem:[#allocation3 + $0x30] sm:$0xff]
        %v1340 = vld [vmem:[#allocation3 + $0x38] sm:$0xff]
        %v1341 = vpack.c.bf16 %v1335, %v1335
        %1342 = vmatpush.bf16.msra.mxu0 %v1181
        %1343 = vmatpush.bf16.msra.mxu0 %v1177
        %1344 = vmatpush.bf16.msra.mxu0 %v1173
        %1345 = vmatpush.bf16.msra.mxu0 %v1169
        %1346 = vmatpush.bf16.msra.mxu0 %v1165
        %1347 = vmatpush.bf16.msra.mxu0 %v1161
        %1348 = vmatpush.bf16.msra.mxu0 %v1157
        %1349 = vmatpush.bf16.msra.mxu0 %v1153
        %1350 = vmatmul.bf16.gmra.mxu0 %v1341
        %v1351 = vpop.f32.mrf.mxu0
        %v1352 = vadd.f32 0.0, %v1351
        %v1353 = vpop.f32.mrf.mxu0
        %1354 = vdwg.mxu0
        %1355 = vmatpush.bf16.msra.mxu0 %v1182
        %1356 = vmatpush.bf16.msra.mxu0 %v1178
        %1357 = vmatpush.bf16.msra.mxu0 %v1174
        %1358 = vmatpush.bf16.msra.mxu0 %v1170
        %1359 = vmatpush.bf16.msra.mxu0 %v1166
        %1360 = vmatpush.bf16.msra.mxu0 %v1162
        %1361 = vmatpush.bf16.msra.mxu0 %v1158
        %1362 = vmatpush.bf16.msra.mxu0 %v1154
        %1363 = vmatmul.bf16.gmra.mxu0 %v1341
        %v1364 = vpop.f32.mrf.mxu0
        %v1365 = vadd.f32 0.0, %v1364
        %v1366 = vpop.f32.mrf.mxu0
        %1367 = vdwg.mxu0
        %1368 = vmatpush.bf16.msra.mxu0 %v1183
        %1369 = vmatpush.bf16.msra.mxu0 %v1179
        %1370 = vmatpush.bf16.msra.mxu0 %v1175
        %1371 = vmatpush.bf16.msra.mxu0 %v1171
        %1372 = vmatpush.bf16.msra.mxu0 %v1167
        %1373 = vmatpush.bf16.msra.mxu0 %v1163
        %1374 = vmatpush.bf16.msra.mxu0 %v1159
        %1375 = vmatpush.bf16.msra.mxu0 %v1155
        %1376 = vmatmul.bf16.gmra.mxu0 %v1341
        %v1377 = vpop.f32.mrf.mxu0
        %v1378 = vadd.f32 0.0, %v1377
        %v1379 = vpop.f32.mrf.mxu0
        %1380 = vdwg.mxu0
        %1381 = vmatpush.bf16.msra.mxu0 %v1184
        %1382 = vmatpush.bf16.msra.mxu0 %v1180
        %1383 = vmatpush.bf16.msra.mxu0 %v1176
        %1384 = vmatpush.bf16.msra.mxu0 %v1172
        %1385 = vmatpush.bf16.msra.mxu0 %v1168
        %1386 = vmatpush.bf16.msra.mxu0 %v1164
        %1387 = vmatpush.bf16.msra.mxu0 %v1160
        %1388 = vmatpush.bf16.msra.mxu0 %v1156
        %1389 = vmatmul.bf16.gmra.mxu0 %v1341
        %v1390 = vpop.f32.mrf.mxu0
        %v1391 = vadd.f32 0.0, %v1390
        %v1392 = vpop.f32.mrf.mxu0
        %1393 = vdwg.mxu0
        %v1394 = vadd.f32 %v1337, %v1352
        %v1395 = vadd.f32 %v1338, %v1365
        %v1396 = vadd.f32 %v1339, %v1378
        %v1397 = vadd.f32 %v1340, %v1391
        %v1398 = vxor.u32 %v1394, 2147483648
        %v1399 = vmul.f32 %v1398, 1.442695
        %v1400 = vpow.pop %v1399
        %v1401 = vadd.f32 %v1400, 1.0
        %v1402 = vrcp.pop %v1401
        %v1403 = vmul.f32 %v1401, %v1402
        %v1404 = vsub.f32 1.0, %v1403
        %v1405 = vmul.f32 %v1402, %v1404
        %v1406 = vadd.f32 %v1402, %v1405
        %vm1407 = vweird.f32 %v1401
        %vm1408 = vweird.f32 %v1402
        %vm1409 = vmor %vm1407, %vm1408
        %v1410 = vsel %vm1409, %v1402, %v1406
        %v1411 = vand.u32 2147483647, %v1401
        %vm1412 = vcmp.eq.f32.partialorder %v1411, 8.507059e+37
        %v1413 = vand.u32 %v1401, 2147483648
        %v1414 = vor.u32 1.1754944e-38, %v1413
        %v1415 = vsel %vm1412, %v1414, %v1410
        %v1416 = vmul.f32 1.0, %v1415
        %v1417 = vxor.u32 %v1395, 2147483648
        %v1418 = vmul.f32 %v1417, 1.442695
        %v1419 = vpow.pop %v1418
        %v1420 = vadd.f32 %v1419, 1.0
        %v1421 = vrcp.pop %v1420
        %v1422 = vmul.f32 %v1420, %v1421
        %v1423 = vsub.f32 1.0, %v1422
        %v1424 = vmul.f32 %v1421, %v1423
        %v1425 = vadd.f32 %v1421, %v1424
        %vm1426 = vweird.f32 %v1420
        %vm1427 = vweird.f32 %v1421
        %vm1428 = vmor %vm1426, %vm1427
        %v1429 = vsel %vm1428, %v1421, %v1425
        %v1430 = vand.u32 2147483647, %v1420
        %vm1431 = vcmp.eq.f32.partialorder %v1430, 8.507059e+37
        %v1432 = vand.u32 %v1420, 2147483648
        %v1433 = vor.u32 1.1754944e-38, %v1432
        %v1434 = vsel %vm1431, %v1433, %v1429
        %v1435 = vmul.f32 1.0, %v1434
        %v1436 = vtanh.pop %v1396
        %v1437 = vxor.u32 %v1397, 2147483648
        %v1438 = vmul.f32 %v1437, 1.442695
        %v1439 = vpow.pop %v1438
        %v1440 = vadd.f32 %v1439, 1.0
        %v1441 = vrcp.pop %v1440
        %v1442 = vmul.f32 %v1440, %v1441
        %v1443 = vsub.f32 1.0, %v1442
        %v1444 = vmul.f32 %v1441, %v1443
        %v1445 = vadd.f32 %v1441, %v1444
        %vm1446 = vweird.f32 %v1440
        %vm1447 = vweird.f32 %v1441
        %vm1448 = vmor %vm1446, %vm1447
        %v1449 = vsel %vm1448, %v1441, %v1445
        %v1450 = vand.u32 2147483647, %v1440
        %vm1451 = vcmp.eq.f32.partialorder %v1450, 8.507059e+37
        %v1452 = vand.u32 %v1440, 2147483648
        %v1453 = vor.u32 1.1754944e-38, %v1452
        %v1454 = vsel %vm1451, %v1453, %v1449
        %v1455 = vmul.f32 1.0, %v1454
        %v1456 = vmul.f32 %v1435, %v1333
        %v1457 = vmul.f32 %v1416, %v1436
        %v1458 = vadd.f32 %v1456, %v1457
        %v1459 = vtanh.pop %v1458
        %v1460 = vmul.f32 %v1455, %v1459
        %1461 = vst [vmem:[#allocation2 + $0x8] sm:$0xff] %v1460
        %v1462 = vld [vmem:[#allocation3 + $0x40] sm:$0xff]
        %v1463 = vld [vmem:[#allocation3 + $0x48] sm:$0xff]
        %v1464 = vld [vmem:[#allocation3 + $0x50] sm:$0xff]
        %v1465 = vld [vmem:[#allocation3 + $0x58] sm:$0xff]
        %v1466 = vpack.c.bf16 %v1460, %v1460
        %1467 = vmatpush.bf16.msra.mxu0 %v1181
        %1468 = vmatpush.bf16.msra.mxu0 %v1177
        %1469 = vmatpush.bf16.msra.mxu0 %v1173
        %1470 = vmatpush.bf16.msra.mxu0 %v1169
        %1471 = vmatpush.bf16.msra.mxu0 %v1165
        %1472 = vmatpush.bf16.msra.mxu0 %v1161
        %1473 = vmatpush.bf16.msra.mxu0 %v1157
        %1474 = vmatpush.bf16.msra.mxu0 %v1153
        %1475 = vmatmul.bf16.gmra.mxu0 %v1466
        %v1476 = vpop.f32.mrf.mxu0
        %v1477 = vadd.f32 0.0, %v1476
        %v1478 = vpop.f32.mrf.mxu0
        %1479 = vdwg.mxu0
        %1480 = vmatpush.bf16.msra.mxu0 %v1182
        %1481 = vmatpush.bf16.msra.mxu0 %v1178
        %1482 = vmatpush.bf16.msra.mxu0 %v1174
        %1483 = vmatpush.bf16.msra.mxu0 %v1170
        %1484 = vmatpush.bf16.msra.mxu0 %v1166
        %1485 = vmatpush.bf16.msra.mxu0 %v1162
        %1486 = vmatpush.bf16.msra.mxu0 %v1158
        %1487 = vmatpush.bf16.msra.mxu0 %v1154
        %1488 = vmatmul.bf16.gmra.mxu0 %v1466
        %v1489 = vpop.f32.mrf.mxu0
        %v1490 = vadd.f32 0.0, %v1489
        %v1491 = vpop.f32.mrf.mxu0
        %1492 = vdwg.mxu0
        %1493 = vmatpush.bf16.msra.mxu0 %v1183
        %1494 = vmatpush.bf16.msra.mxu0 %v1179
        %1495 = vmatpush.bf16.msra.mxu0 %v1175
        %1496 = vmatpush.bf16.msra.mxu0 %v1171
        %1497 = vmatpush.bf16.msra.mxu0 %v1167
        %1498 = vmatpush.bf16.msra.mxu0 %v1163
        %1499 = vmatpush.bf16.msra.mxu0 %v1159
        %1500 = vmatpush.bf16.msra.mxu0 %v1155
        %1501 = vmatmul.bf16.gmra.mxu0 %v1466
        %v1502 = vpop.f32.mrf.mxu0
        %v1503 = vadd.f32 0.0, %v1502
        %v1504 = vpop.f32.mrf.mxu0
        %1505 = vdwg.mxu0
        %1506 = vmatpush.bf16.msra.mxu0 %v1184
        %1507 = vmatpush.bf16.msra.mxu0 %v1180
        %1508 = vmatpush.bf16.msra.mxu0 %v1176
        %1509 = vmatpush.bf16.msra.mxu0 %v1172
        %1510 = vmatpush.bf16.msra.mxu0 %v1168
        %1511 = vmatpush.bf16.msra.mxu0 %v1164
        %1512 = vmatpush.bf16.msra.mxu0 %v1160
        %1513 = vmatpush.bf16.msra.mxu0 %v1156
        %1514 = vmatmul.bf16.gmra.mxu0 %v1466
        %v1515 = vpop.f32.mrf.mxu0
        %v1516 = vadd.f32 0.0, %v1515
        %v1517 = vpop.f32.mrf.mxu0
        %1518 = vdwg.mxu0
        %v1519 = vadd.f32 %v1462, %v1477
        %v1520 = vadd.f32 %v1463, %v1490
        %v1521 = vadd.f32 %v1464, %v1503
        %v1522 = vadd.f32 %v1465, %v1516
        %v1523 = vxor.u32 %v1519, 2147483648
        %v1524 = vmul.f32 %v1523, 1.442695
        %v1525 = vpow.pop %v1524
        %v1526 = vadd.f32 %v1525, 1.0
        %v1527 = vrcp.pop %v1526
        %v1528 = vmul.f32 %v1526, %v1527
        %v1529 = vsub.f32 1.0, %v1528
        %v1530 = vmul.f32 %v1527, %v1529
        %v1531 = vadd.f32 %v1527, %v1530
        %vm1532 = vweird.f32 %v1526
        %vm1533 = vweird.f32 %v1527
        %vm1534 = vmor %vm1532, %vm1533
        %v1535 = vsel %vm1534, %v1527, %v1531
        %v1536 = vand.u32 2147483647, %v1526
        %vm1537 = vcmp.eq.f32.partialorder %v1536, 8.507059e+37
        %v1538 = vand.u32 %v1526, 2147483648
        %v1539 = vor.u32 1.1754944e-38, %v1538
        %v1540 = vsel %vm1537, %v1539, %v1535
        %v1541 = vmul.f32 1.0, %v1540
        %v1542 = vxor.u32 %v1520, 2147483648
        %v1543 = vmul.f32 %v1542, 1.442695
        %v1544 = vpow.pop %v1543
        %v1545 = vadd.f32 %v1544, 1.0
        %v1546 = vrcp.pop %v1545
        %v1547 = vmul.f32 %v1545, %v1546
        %v1548 = vsub.f32 1.0, %v1547
        %v1549 = vmul.f32 %v1546, %v1548
        %v1550 = vadd.f32 %v1546, %v1549
        %vm1551 = vweird.f32 %v1545
        %vm1552 = vweird.f32 %v1546
        %vm1553 = vmor %vm1551, %vm1552
        %v1554 = vsel %vm1553, %v1546, %v1550
        %v1555 = vand.u32 2147483647, %v1545
        %vm1556 = vcmp.eq.f32.partialorder %v1555, 8.507059e+37
        %v1557 = vand.u32 %v1545, 2147483648
        %v1558 = vor.u32 1.1754944e-38, %v1557
        %v1559 = vsel %vm1556, %v1558, %v1554
        %v1560 = vmul.f32 1.0, %v1559
        %v1561 = vtanh.pop %v1521
        %v1562 = vxor.u32 %v1522, 2147483648
        %v1563 = vmul.f32 %v1562, 1.442695
        %v1564 = vpow.pop %v1563
        %v1565 = vadd.f32 %v1564, 1.0
        %v1566 = vrcp.pop %v1565
        %v1567 = vmul.f32 %v1565, %v1566
        %v1568 = vsub.f32 1.0, %v1567
        %v1569 = vmul.f32 %v1566, %v1568
        %v1570 = vadd.f32 %v1566, %v1569
        %vm1571 = vweird.f32 %v1565
        %vm1572 = vweird.f32 %v1566
        %vm1573 = vmor %vm1571, %vm1572
        %v1574 = vsel %vm1573, %v1566, %v1570
        %v1575 = vand.u32 2147483647, %v1565
        %vm1576 = vcmp.eq.f32.partialorder %v1575, 8.507059e+37
        %v1577 = vand.u32 %v1565, 2147483648
        %v1578 = vor.u32 1.1754944e-38, %v1577
        %v1579 = vsel %vm1576, %v1578, %v1574
        %v1580 = vmul.f32 1.0, %v1579
        %v1581 = vmul.f32 %v1560, %v1458
        %v1582 = vmul.f32 %v1541, %v1561
        %v1583 = vadd.f32 %v1581, %v1582
        %v1584 = vtanh.pop %v1583
        %v1585 = vmul.f32 %v1580, %v1584
        %1586 = vst [vmem:[#allocation2 + $0x10] sm:$0xff] %v1585
        %v1587 = vld [vmem:[#allocation3 + $0x60] sm:$0xff]
        %v1588 = vld [vmem:[#allocation3 + $0x68] sm:$0xff]
        %v1589 = vld [vmem:[#allocation3 + $0x70] sm:$0xff]
        %v1590 = vld [vmem:[#allocation3 + $0x78] sm:$0xff]
        %v1591 = vpack.c.bf16 %v1585, %v1585
        %1592 = vmatpush.bf16.msra.mxu0 %v1181
        %1593 = vmatpush.bf16.msra.mxu0 %v1177
        %1594 = vmatpush.bf16.msra.mxu0 %v1173
        %1595 = vmatpush.bf16.msra.mxu0 %v1169
        %1596 = vmatpush.bf16.msra.mxu0 %v1165
        %1597 = vmatpush.bf16.msra.mxu0 %v1161
        %1598 = vmatpush.bf16.msra.mxu0 %v1157
        %1599 = vmatpush.bf16.msra.mxu0 %v1153
        %1600 = vmatmul.bf16.gmra.mxu0 %v1591
        %v1601 = vpop.f32.mrf.mxu0
        %v1602 = vadd.f32 0.0, %v1601
        %v1603 = vpop.f32.mrf.mxu0
        %1604 = vdwg.mxu0
        %1605 = vmatpush.bf16.msra.mxu0 %v1182
        %1606 = vmatpush.bf16.msra.mxu0 %v1178
        %1607 = vmatpush.bf16.msra.mxu0 %v1174
        %1608 = vmatpush.bf16.msra.mxu0 %v1170
        %1609 = vmatpush.bf16.msra.mxu0 %v1166
        %1610 = vmatpush.bf16.msra.mxu0 %v1162
        %1611 = vmatpush.bf16.msra.mxu0 %v1158
        %1612 = vmatpush.bf16.msra.mxu0 %v1154
        %1613 = vmatmul.bf16.gmra.mxu0 %v1591
        %v1614 = vpop.f32.mrf.mxu0
        %v1615 = vadd.f32 0.0, %v1614
        %v1616 = vpop.f32.mrf.mxu0
        %1617 = vdwg.mxu0
        %1618 = vmatpush.bf16.msra.mxu0 %v1183
        %1619 = vmatpush.bf16.msra.mxu0 %v1179
        %1620 = vmatpush.bf16.msra.mxu0 %v1175
        %1621 = vmatpush.bf16.msra.mxu0 %v1171
        %1622 = vmatpush.bf16.msra.mxu0 %v1167
        %1623 = vmatpush.bf16.msra.mxu0 %v1163
        %1624 = vmatpush.bf16.msra.mxu0 %v1159
        %1625 = vmatpush.bf16.msra.mxu0 %v1155
        %1626 = vmatmul.bf16.gmra.mxu0 %v1591
        %v1627 = vpop.f32.mrf.mxu0
        %v1628 = vadd.f32 0.0, %v1627
        %v1629 = vpop.f32.mrf.mxu0
        %1630 = vdwg.mxu0
        %1631 = vmatpush.bf16.msra.mxu0 %v1184
        %1632 = vmatpush.bf16.msra.mxu0 %v1180
        %1633 = vmatpush.bf16.msra.mxu0 %v1176
        %1634 = vmatpush.bf16.msra.mxu0 %v1172
        %1635 = vmatpush.bf16.msra.mxu0 %v1168
        %1636 = vmatpush.bf16.msra.mxu0 %v1164
        %1637 = vmatpush.bf16.msra.mxu0 %v1160
        %1638 = vmatpush.bf16.msra.mxu0 %v1156
        %1639 = vmatmul.bf16.gmra.mxu0 %v1591
        %v1640 = vpop.f32.mrf.mxu0
        %v1641 = vadd.f32 0.0, %v1640
        %v1642 = vpop.f32.mrf.mxu0
        %1643 = vdwg.mxu0
        %v1644 = vadd.f32 %v1587, %v1602
        %v1645 = vadd.f32 %v1588, %v1615
        %v1646 = vadd.f32 %v1589, %v1628
        %v1647 = vadd.f32 %v1590, %v1641
        %v1648 = vxor.u32 %v1644, 2147483648
        %v1649 = vmul.f32 %v1648, 1.442695
        %v1650 = vpow.pop %v1649
        %v1651 = vadd.f32 %v1650, 1.0
        %v1652 = vrcp.pop %v1651
        %v1653 = vmul.f32 %v1651, %v1652
        %v1654 = vsub.f32 1.0, %v1653
        %v1655 = vmul.f32 %v1652, %v1654
        %v1656 = vadd.f32 %v1652, %v1655
        %vm1657 = vweird.f32 %v1651
        %vm1658 = vweird.f32 %v1652
        %vm1659 = vmor %vm1657, %vm1658
        %v1660 = vsel %vm1659, %v1652, %v1656
        %v1661 = vand.u32 2147483647, %v1651
        %vm1662 = vcmp.eq.f32.partialorder %v1661, 8.507059e+37
        %v1663 = vand.u32 %v1651, 2147483648
        %v1664 = vor.u32 1.1754944e-38, %v1663
        %v1665 = vsel %vm1662, %v1664, %v1660
        %v1666 = vmul.f32 1.0, %v1665
        %v1667 = vxor.u32 %v1645, 2147483648
        %v1668 = vmul.f32 %v1667, 1.442695
        %v1669 = vpow.pop %v1668
        %v1670 = vadd.f32 %v1669, 1.0
        %v1671 = vrcp.pop %v1670
        %v1672 = vmul.f32 %v1670, %v1671
        %v1673 = vsub.f32 1.0, %v1672
        %v1674 = vmul.f32 %v1671, %v1673
        %v1675 = vadd.f32 %v1671, %v1674
        %vm1676 = vweird.f32 %v1670
        %vm1677 = vweird.f32 %v1671
        %vm1678 = vmor %vm1676, %vm1677
        %v1679 = vsel %vm1678, %v1671, %v1675
        %v1680 = vand.u32 2147483647, %v1670
        %vm1681 = vcmp.eq.f32.partialorder %v1680, 8.507059e+37
        %v1682 = vand.u32 %v1670, 2147483648
        %v1683 = vor.u32 1.1754944e-38, %v1682
        %v1684 = vsel %vm1681, %v1683, %v1679
        %v1685 = vmul.f32 1.0, %v1684
        %v1686 = vtanh.pop %v1646
        %v1687 = vxor.u32 %v1647, 2147483648
        %v1688 = vmul.f32 %v1687, 1.442695
        %v1689 = vpow.pop %v1688
        %v1690 = vadd.f32 %v1689, 1.0
        %v1691 = vrcp.pop %v1690
        %v1692 = vmul.f32 %v1690, %v1691
        %v1693 = vsub.f32 1.0, %v1692
        %v1694 = vmul.f32 %v1691, %v1693
        %v1695 = vadd.f32 %v1691, %v1694
        %vm1696 = vweird.f32 %v1690
        %vm1697 = vweird.f32 %v1691
        %vm1698 = vmor %vm1696, %vm1697
        %v1699 = vsel %vm1698, %v1691, %v1695
        %v1700 = vand.u32 2147483647, %v1690
        %vm1701 = vcmp.eq.f32.partialorder %v1700, 8.507059e+37
        %v1702 = vand.u32 %v1690, 2147483648
        %v1703 = vor.u32 1.1754944e-38, %v1702
        %v1704 = vsel %vm1701, %v1703, %v1699
        %v1705 = vmul.f32 1.0, %v1704
        %v1706 = vmul.f32 %v1685, %v1583
        %v1707 = vmul.f32 %v1666, %v1686
        %v1708 = vadd.f32 %v1706, %v1707
        %v1709 = vtanh.pop %v1708
        %v1710 = vmul.f32 %v1705, %v1709
        %1711 = vst [vmem:[#allocation2 + $0x18] sm:$0xff] %v1710
        %v1712 = vld [vmem:[#allocation3 + $0x80] sm:$0xff]
        %v1713 = vld [vmem:[#allocation3 + $0x88] sm:$0xff]
        %v1714 = vld [vmem:[#allocation3 + $0x90] sm:$0xff]
        %v1715 = vld [vmem:[#allocation3 + $0x98] sm:$0xff]
        %v1716 = vpack.c.bf16 %v1710, %v1710
        %1717 = vmatpush.bf16.msra.mxu0 %v1181
        %1718 = vmatpush.bf16.msra.mxu0 %v1177
        %1719 = vmatpush.bf16.msra.mxu0 %v1173
        %1720 = vmatpush.bf16.msra.mxu0 %v1169
        %1721 = vmatpush.bf16.msra.mxu0 %v1165
        %1722 = vmatpush.bf16.msra.mxu0 %v1161
        %1723 = vmatpush.bf16.msra.mxu0 %v1157
        %1724 = vmatpush.bf16.msra.mxu0 %v1153
        %1725 = vmatmul.bf16.gmra.mxu0 %v1716
        %v1726 = vpop.f32.mrf.mxu0
        %v1727 = vadd.f32 0.0, %v1726
        %v1728 = vpop.f32.mrf.mxu0
        %1729 = vdwg.mxu0
        %1730 = vmatpush.bf16.msra.mxu0 %v1182
        %1731 = vmatpush.bf16.msra.mxu0 %v1178
        %1732 = vmatpush.bf16.msra.mxu0 %v1174
        %1733 = vmatpush.bf16.msra.mxu0 %v1170
        %1734 = vmatpush.bf16.msra.mxu0 %v1166
        %1735 = vmatpush.bf16.msra.mxu0 %v1162
        %1736 = vmatpush.bf16.msra.mxu0 %v1158
        %1737 = vmatpush.bf16.msra.mxu0 %v1154
        %1738 = vmatmul.bf16.gmra.mxu0 %v1716
        %v1739 = vpop.f32.mrf.mxu0
        %v1740 = vadd.f32 0.0, %v1739
        %v1741 = vpop.f32.mrf.mxu0
        %1742 = vdwg.mxu0
        %1743 = vmatpush.bf16.msra.mxu0 %v1183
        %1744 = vmatpush.bf16.msra.mxu0 %v1179
        %1745 = vmatpush.bf16.msra.mxu0 %v1175
        %1746 = vmatpush.bf16.msra.mxu0 %v1171
        %1747 = vmatpush.bf16.msra.mxu0 %v1167
        %1748 = vmatpush.bf16.msra.mxu0 %v1163
        %1749 = vmatpush.bf16.msra.mxu0 %v1159
        %1750 = vmatpush.bf16.msra.mxu0 %v1155
        %1751 = vmatmul.bf16.gmra.mxu0 %v1716
        %v1752 = vpop.f32.mrf.mxu0
        %v1753 = vadd.f32 0.0, %v1752
        %v1754 = vpop.f32.mrf.mxu0
        %1755 = vdwg.mxu0
        %1756 = vmatpush.bf16.msra.mxu0 %v1184
        %1757 = vmatpush.bf16.msra.mxu0 %v1180
        %1758 = vmatpush.bf16.msra.mxu0 %v1176
        %1759 = vmatpush.bf16.msra.mxu0 %v1172
        %1760 = vmatpush.bf16.msra.mxu0 %v1168
        %1761 = vmatpush.bf16.msra.mxu0 %v1164
        %1762 = vmatpush.bf16.msra.mxu0 %v1160
        %1763 = vmatpush.bf16.msra.mxu0 %v1156
        %1764 = vmatmul.bf16.gmra.mxu0 %v1716
        %v1765 = vpop.f32.mrf.mxu0
        %v1766 = vadd.f32 0.0, %v1765
        %v1767 = vpop.f32.mrf.mxu0
        %1768 = vdwg.mxu0
        %v1769 = vadd.f32 %v1712, %v1727
        %v1770 = vadd.f32 %v1713, %v1740
        %v1771 = vadd.f32 %v1714, %v1753
        %v1772 = vadd.f32 %v1715, %v1766
        %v1773 = vxor.u32 %v1769, 2147483648
        %v1774 = vmul.f32 %v1773, 1.442695
        %v1775 = vpow.pop %v1774
        %v1776 = vadd.f32 %v1775, 1.0
        %v1777 = vrcp.pop %v1776
        %v1778 = vmul.f32 %v1776, %v1777
        %v1779 = vsub.f32 1.0, %v1778
        %v1780 = vmul.f32 %v1777, %v1779
        %v1781 = vadd.f32 %v1777, %v1780
        %vm1782 = vweird.f32 %v1776
        %vm1783 = vweird.f32 %v1777
        %vm1784 = vmor %vm1782, %vm1783
        %v1785 = vsel %vm1784, %v1777, %v1781
        %v1786 = vand.u32 2147483647, %v1776
        %vm1787 = vcmp.eq.f32.partialorder %v1786, 8.507059e+37
        %v1788 = vand.u32 %v1776, 2147483648
        %v1789 = vor.u32 1.1754944e-38, %v1788
        %v1790 = vsel %vm1787, %v1789, %v1785
        %v1791 = vmul.f32 1.0, %v1790
        %v1792 = vxor.u32 %v1770, 2147483648
        %v1793 = vmul.f32 %v1792, 1.442695
        %v1794 = vpow.pop %v1793
        %v1795 = vadd.f32 %v1794, 1.0
        %v1796 = vrcp.pop %v1795
        %v1797 = vmul.f32 %v1795, %v1796
        %v1798 = vsub.f32 1.0, %v1797
        %v1799 = vmul.f32 %v1796, %v1798
        %v1800 = vadd.f32 %v1796, %v1799
        %vm1801 = vweird.f32 %v1795
        %vm1802 = vweird.f32 %v1796
        %vm1803 = vmor %vm1801, %vm1802
        %v1804 = vsel %vm1803, %v1796, %v1800
        %v1805 = vand.u32 2147483647, %v1795
        %vm1806 = vcmp.eq.f32.partialorder %v1805, 8.507059e+37
        %v1807 = vand.u32 %v1795, 2147483648
        %v1808 = vor.u32 1.1754944e-38, %v1807
        %v1809 = vsel %vm1806, %v1808, %v1804
        %v1810 = vmul.f32 1.0, %v1809
        %v1811 = vtanh.pop %v1771
        %v1812 = vxor.u32 %v1772, 2147483648
        %v1813 = vmul.f32 %v1812, 1.442695
        %v1814 = vpow.pop %v1813
        %v1815 = vadd.f32 %v1814, 1.0
        %v1816 = vrcp.pop %v1815
        %v1817 = vmul.f32 %v1815, %v1816
        %v1818 = vsub.f32 1.0, %v1817
        %v1819 = vmul.f32 %v1816, %v1818
        %v1820 = vadd.f32 %v1816, %v1819
        %vm1821 = vweird.f32 %v1815
        %vm1822 = vweird.f32 %v1816
        %vm1823 = vmor %vm1821, %vm1822
        %v1824 = vsel %vm1823, %v1816, %v1820
        %v1825 = vand.u32 2147483647, %v1815
        %vm1826 = vcmp.eq.f32.partialorder %v1825, 8.507059e+37
        %v1827 = vand.u32 %v1815, 2147483648
        %v1828 = vor.u32 1.1754944e-38, %v1827
        %v1829 = vsel %vm1826, %v1828, %v1824
        %v1830 = vmul.f32 1.0, %v1829
        %v1831 = vmul.f32 %v1810, %v1708
        %v1832 = vmul.f32 %v1791, %v1811
        %v1833 = vadd.f32 %v1831, %v1832
        %v1834 = vtanh.pop %v1833
        %v1835 = vmul.f32 %v1830, %v1834
        %1836 = vst [vmem:[#allocation2 + $0x20] sm:$0xff] %v1835
        %v1837 = vld [vmem:[#allocation3 + $0xa0] sm:$0xff]
        %v1838 = vld [vmem:[#allocation3 + $0xa8] sm:$0xff]
        %v1839 = vld [vmem:[#allocation3 + $0xb0] sm:$0xff]
        %v1840 = vld [vmem:[#allocation3 + $0xb8] sm:$0xff]
        %v1841 = vpack.c.bf16 %v1835, %v1835
        %1842 = vmatpush.bf16.msra.mxu0 %v1181
        %1843 = vmatpush.bf16.msra.mxu0 %v1177
        %1844 = vmatpush.bf16.msra.mxu0 %v1173
        %1845 = vmatpush.bf16.msra.mxu0 %v1169
        %1846 = vmatpush.bf16.msra.mxu0 %v1165
        %1847 = vmatpush.bf16.msra.mxu0 %v1161
        %1848 = vmatpush.bf16.msra.mxu0 %v1157
        %1849 = vmatpush.bf16.msra.mxu0 %v1153
        %1850 = vmatmul.bf16.gmra.mxu0 %v1841
        %v1851 = vpop.f32.mrf.mxu0
        %v1852 = vadd.f32 0.0, %v1851
        %v1853 = vpop.f32.mrf.mxu0
        %1854 = vdwg.mxu0
        %1855 = vmatpush.bf16.msra.mxu0 %v1182
        %1856 = vmatpush.bf16.msra.mxu0 %v1178
        %1857 = vmatpush.bf16.msra.mxu0 %v1174
        %1858 = vmatpush.bf16.msra.mxu0 %v1170
        %1859 = vmatpush.bf16.msra.mxu0 %v1166
        %1860 = vmatpush.bf16.msra.mxu0 %v1162
        %1861 = vmatpush.bf16.msra.mxu0 %v1158
        %1862 = vmatpush.bf16.msra.mxu0 %v1154
        %1863 = vmatmul.bf16.gmra.mxu0 %v1841
        %v1864 = vpop.f32.mrf.mxu0
        %v1865 = vadd.f32 0.0, %v1864
        %v1866 = vpop.f32.mrf.mxu0
        %1867 = vdwg.mxu0
        %1868 = vmatpush.bf16.msra.mxu0 %v1183
        %1869 = vmatpush.bf16.msra.mxu0 %v1179
        %1870 = vmatpush.bf16.msra.mxu0 %v1175
        %1871 = vmatpush.bf16.msra.mxu0 %v1171
        %1872 = vmatpush.bf16.msra.mxu0 %v1167
        %1873 = vmatpush.bf16.msra.mxu0 %v1163
        %1874 = vmatpush.bf16.msra.mxu0 %v1159
        %1875 = vmatpush.bf16.msra.mxu0 %v1155
        %1876 = vmatmul.bf16.gmra.mxu0 %v1841
        %v1877 = vpop.f32.mrf.mxu0
        %v1878 = vadd.f32 0.0, %v1877
        %v1879 = vpop.f32.mrf.mxu0
        %1880 = vdwg.mxu0
        %1881 = vmatpush.bf16.msra.mxu0 %v1184
        %1882 = vmatpush.bf16.msra.mxu0 %v1180
        %1883 = vmatpush.bf16.msra.mxu0 %v1176
        %1884 = vmatpush.bf16.msra.mxu0 %v1172
        %1885 = vmatpush.bf16.msra.mxu0 %v1168
        %1886 = vmatpush.bf16.msra.mxu0 %v1164
        %1887 = vmatpush.bf16.msra.mxu0 %v1160
        %1888 = vmatpush.bf16.msra.mxu0 %v1156
        %1889 = vmatmul.bf16.gmra.mxu0 %v1841
        %v1890 = vpop.f32.mrf.mxu0
        %v1891 = vadd.f32 0.0, %v1890
        %v1892 = vpop.f32.mrf.mxu0
        %1893 = vdwg.mxu0
        %v1894 = vadd.f32 %v1837, %v1852
        %v1895 = vadd.f32 %v1838, %v1865
        %v1896 = vadd.f32 %v1839, %v1878
        %v1897 = vadd.f32 %v1840, %v1891
        %v1898 = vxor.u32 %v1894, 2147483648
        %v1899 = vmul.f32 %v1898, 1.442695
        %v1900 = vpow.pop %v1899
        %v1901 = vadd.f32 %v1900, 1.0
        %v1902 = vrcp.pop %v1901
        %v1903 = vmul.f32 %v1901, %v1902
        %v1904 = vsub.f32 1.0, %v1903
        %v1905 = vmul.f32 %v1902, %v1904
        %v1906 = vadd.f32 %v1902, %v1905
        %vm1907 = vweird.f32 %v1901
        %vm1908 = vweird.f32 %v1902
        %vm1909 = vmor %vm1907, %vm1908
        %v1910 = vsel %vm1909, %v1902, %v1906
        %v1911 = vand.u32 2147483647, %v1901
        %vm1912 = vcmp.eq.f32.partialorder %v1911, 8.507059e+37
        %v1913 = vand.u32 %v1901, 2147483648
        %v1914 = vor.u32 1.1754944e-38, %v1913
        %v1915 = vsel %vm1912, %v1914, %v1910
        %v1916 = vmul.f32 1.0, %v1915
        %v1917 = vxor.u32 %v1895, 2147483648
        %v1918 = vmul.f32 %v1917, 1.442695
        %v1919 = vpow.pop %v1918
        %v1920 = vadd.f32 %v1919, 1.0
        %v1921 = vrcp.pop %v1920
        %v1922 = vmul.f32 %v1920, %v1921
        %v1923 = vsub.f32 1.0, %v1922
        %v1924 = vmul.f32 %v1921, %v1923
        %v1925 = vadd.f32 %v1921, %v1924
        %vm1926 = vweird.f32 %v1920
        %vm1927 = vweird.f32 %v1921
        %vm1928 = vmor %vm1926, %vm1927
        %v1929 = vsel %vm1928, %v1921, %v1925
        %v1930 = vand.u32 2147483647, %v1920
        %vm1931 = vcmp.eq.f32.partialorder %v1930, 8.507059e+37
        %v1932 = vand.u32 %v1920, 2147483648
        %v1933 = vor.u32 1.1754944e-38, %v1932
        %v1934 = vsel %vm1931, %v1933, %v1929
        %v1935 = vmul.f32 1.0, %v1934
        %v1936 = vtanh.pop %v1896
        %v1937 = vxor.u32 %v1897, 2147483648
        %v1938 = vmul.f32 %v1937, 1.442695
        %v1939 = vpow.pop %v1938
        %v1940 = vadd.f32 %v1939, 1.0
        %v1941 = vrcp.pop %v1940
        %v1942 = vmul.f32 %v1940, %v1941
        %v1943 = vsub.f32 1.0, %v1942
        %v1944 = vmul.f32 %v1941, %v1943
        %v1945 = vadd.f32 %v1941, %v1944
        %vm1946 = vweird.f32 %v1940
        %vm1947 = vweird.f32 %v1941
        %vm1948 = vmor %vm1946, %vm1947
        %v1949 = vsel %vm1948, %v1941, %v1945
        %v1950 = vand.u32 2147483647, %v1940
        %vm1951 = vcmp.eq.f32.partialorder %v1950, 8.507059e+37
        %v1952 = vand.u32 %v1940, 2147483648
        %v1953 = vor.u32 1.1754944e-38, %v1952
        %v1954 = vsel %vm1951, %v1953, %v1949
        %v1955 = vmul.f32 1.0, %v1954
        %v1956 = vmul.f32 %v1935, %v1833
        %v1957 = vmul.f32 %v1916, %v1936
        %v1958 = vadd.f32 %v1956, %v1957
        %v1959 = vtanh.pop %v1958
        %v1960 = vmul.f32 %v1955, %v1959
        %1961 = vst [vmem:[#allocation2 + $0x28] sm:$0xff] %v1960
        %v1962 = vld [vmem:[#allocation3 + $0xc0] sm:$0xff]
        %v1963 = vld [vmem:[#allocation3 + $0xc8] sm:$0xff]
        %v1964 = vld [vmem:[#allocation3 + $0xd0] sm:$0xff]
        %v1965 = vld [vmem:[#allocation3 + $0xd8] sm:$0xff]
        %v1966 = vpack.c.bf16 %v1960, %v1960
        %1967 = vmatpush.bf16.msra.mxu0 %v1181
        %1968 = vmatpush.bf16.msra.mxu0 %v1177
        %1969 = vmatpush.bf16.msra.mxu0 %v1173
        %1970 = vmatpush.bf16.msra.mxu0 %v1169
        %1971 = vmatpush.bf16.msra.mxu0 %v1165
        %1972 = vmatpush.bf16.msra.mxu0 %v1161
        %1973 = vmatpush.bf16.msra.mxu0 %v1157
        %1974 = vmatpush.bf16.msra.mxu0 %v1153
        %1975 = vmatmul.bf16.gmra.mxu0 %v1966
        %v1976 = vpop.f32.mrf.mxu0
        %v1977 = vadd.f32 0.0, %v1976
        %v1978 = vpop.f32.mrf.mxu0
        %1979 = vdwg.mxu0
        %1980 = vmatpush.bf16.msra.mxu0 %v1182
        %1981 = vmatpush.bf16.msra.mxu0 %v1178
        %1982 = vmatpush.bf16.msra.mxu0 %v1174
        %1983 = vmatpush.bf16.msra.mxu0 %v1170
        %1984 = vmatpush.bf16.msra.mxu0 %v1166
        %1985 = vmatpush.bf16.msra.mxu0 %v1162
        %1986 = vmatpush.bf16.msra.mxu0 %v1158
        %1987 = vmatpush.bf16.msra.mxu0 %v1154
        %1988 = vmatmul.bf16.gmra.mxu0 %v1966
        %v1989 = vpop.f32.mrf.mxu0
        %v1990 = vadd.f32 0.0, %v1989
        %v1991 = vpop.f32.mrf.mxu0
        %1992 = vdwg.mxu0
        %1993 = vmatpush.bf16.msra.mxu0 %v1183
        %1994 = vmatpush.bf16.msra.mxu0 %v1179
        %1995 = vmatpush.bf16.msra.mxu0 %v1175
        %1996 = vmatpush.bf16.msra.mxu0 %v1171
        %1997 = vmatpush.bf16.msra.mxu0 %v1167
        %1998 = vmatpush.bf16.msra.mxu0 %v1163
        %1999 = vmatpush.bf16.msra.mxu0 %v1159
        %2000 = vmatpush.bf16.msra.mxu0 %v1155
        %2001 = vmatmul.bf16.gmra.mxu0 %v1966
        %v2002 = vpop.f32.mrf.mxu0
        %v2003 = vadd.f32 0.0, %v2002
        %v2004 = vpop.f32.mrf.mxu0
        %2005 = vdwg.mxu0
        %2006 = vmatpush.bf16.msra.mxu0 %v1184
        %2007 = vmatpush.bf16.msra.mxu0 %v1180
        %2008 = vmatpush.bf16.msra.mxu0 %v1176
        %2009 = vmatpush.bf16.msra.mxu0 %v1172
        %2010 = vmatpush.bf16.msra.mxu0 %v1168
        %2011 = vmatpush.bf16.msra.mxu0 %v1164
        %2012 = vmatpush.bf16.msra.mxu0 %v1160
        %2013 = vmatpush.bf16.msra.mxu0 %v1156
        %2014 = vmatmul.bf16.gmra.mxu0 %v1966
        %v2015 = vpop.f32.mrf.mxu0
        %v2016 = vadd.f32 0.0, %v2015
        %v2017 = vpop.f32.mrf.mxu0
        %2018 = vdwg.mxu0
        %v2019 = vadd.f32 %v1962, %v1977
        %v2020 = vadd.f32 %v1963, %v1990
        %v2021 = vadd.f32 %v1964, %v2003
        %v2022 = vadd.f32 %v1965, %v2016
        %v2023 = vxor.u32 %v2019, 2147483648
        %v2024 = vmul.f32 %v2023, 1.442695
        %v2025 = vpow.pop %v2024
        %v2026 = vadd.f32 %v2025, 1.0
        %v2027 = vrcp.pop %v2026
        %v2028 = vmul.f32 %v2026, %v2027
        %v2029 = vsub.f32 1.0, %v2028
        %v2030 = vmul.f32 %v2027, %v2029
        %v2031 = vadd.f32 %v2027, %v2030
        %vm2032 = vweird.f32 %v2026
        %vm2033 = vweird.f32 %v2027
        %vm2034 = vmor %vm2032, %vm2033
        %v2035 = vsel %vm2034, %v2027, %v2031
        %v2036 = vand.u32 2147483647, %v2026
        %vm2037 = vcmp.eq.f32.partialorder %v2036, 8.507059e+37
        %v2038 = vand.u32 %v2026, 2147483648
        %v2039 = vor.u32 1.1754944e-38, %v2038
        %v2040 = vsel %vm2037, %v2039, %v2035
        %v2041 = vmul.f32 1.0, %v2040
        %v2042 = vxor.u32 %v2020, 2147483648
        %v2043 = vmul.f32 %v2042, 1.442695
        %v2044 = vpow.pop %v2043
        %v2045 = vadd.f32 %v2044, 1.0
        %v2046 = vrcp.pop %v2045
        %v2047 = vmul.f32 %v2045, %v2046
        %v2048 = vsub.f32 1.0, %v2047
        %v2049 = vmul.f32 %v2046, %v2048
        %v2050 = vadd.f32 %v2046, %v2049
        %vm2051 = vweird.f32 %v2045
        %vm2052 = vweird.f32 %v2046
        %vm2053 = vmor %vm2051, %vm2052
        %v2054 = vsel %vm2053, %v2046, %v2050
        %v2055 = vand.u32 2147483647, %v2045
        %vm2056 = vcmp.eq.f32.partialorder %v2055, 8.507059e+37
        %v2057 = vand.u32 %v2045, 2147483648
        %v2058 = vor.u32 1.1754944e-38, %v2057
        %v2059 = vsel %vm2056, %v2058, %v2054
        %v2060 = vmul.f32 1.0, %v2059
        %v2061 = vtanh.pop %v2021
        %v2062 = vxor.u32 %v2022, 2147483648
        %v2063 = vmul.f32 %v2062, 1.442695
        %v2064 = vpow.pop %v2063
        %v2065 = vadd.f32 %v2064, 1.0
        %v2066 = vrcp.pop %v2065
        %v2067 = vmul.f32 %v2065, %v2066
        %v2068 = vsub.f32 1.0, %v2067
        %v2069 = vmul.f32 %v2066, %v2068
        %v2070 = vadd.f32 %v2066, %v2069
        %vm2071 = vweird.f32 %v2065
        %vm2072 = vweird.f32 %v2066
        %vm2073 = vmor %vm2071, %vm2072
        %v2074 = vsel %vm2073, %v2066, %v2070
        %v2075 = vand.u32 2147483647, %v2065
        %vm2076 = vcmp.eq.f32.partialorder %v2075, 8.507059e+37
        %v2077 = vand.u32 %v2065, 2147483648
        %v2078 = vor.u32 1.1754944e-38, %v2077
        %v2079 = vsel %vm2076, %v2078, %v2074
        %v2080 = vmul.f32 1.0, %v2079
        %v2081 = vmul.f32 %v2060, %v1958
        %v2082 = vmul.f32 %v2041, %v2061
        %v2083 = vadd.f32 %v2081, %v2082
        %v2084 = vtanh.pop %v2083
        %v2085 = vmul.f32 %v2080, %v2084
        %2086 = vst [vmem:[#allocation2 + $0x30] sm:$0xff] %v2085
        %v2087 = vld [vmem:[#allocation3 + $0xe0] sm:$0xff]
        %v2088 = vld [vmem:[#allocation3 + $0xe8] sm:$0xff]
        %v2089 = vld [vmem:[#allocation3 + $0xf0] sm:$0xff]
        %v2090 = vld [vmem:[#allocation3 + $0xf8] sm:$0xff]
        %v2091 = vpack.c.bf16 %v2085, %v2085
        %2092 = vmatpush.bf16.msra.mxu0 %v1181
        %2093 = vmatpush.bf16.msra.mxu0 %v1177
        %2094 = vmatpush.bf16.msra.mxu0 %v1173
        %2095 = vmatpush.bf16.msra.mxu0 %v1169
        %2096 = vmatpush.bf16.msra.mxu0 %v1165
        %2097 = vmatpush.bf16.msra.mxu0 %v1161
        %2098 = vmatpush.bf16.msra.mxu0 %v1157
        %2099 = vmatpush.bf16.msra.mxu0 %v1153
        %2100 = vmatmul.bf16.gmra.mxu0 %v2091
        %v2101 = vpop.f32.mrf.mxu0
        %v2102 = vadd.f32 0.0, %v2101
        %v2103 = vpop.f32.mrf.mxu0
        %2104 = vdwg.mxu0
        %2105 = vmatpush.bf16.msra.mxu0 %v1182
        %2106 = vmatpush.bf16.msra.mxu0 %v1178
        %2107 = vmatpush.bf16.msra.mxu0 %v1174
        %2108 = vmatpush.bf16.msra.mxu0 %v1170
        %2109 = vmatpush.bf16.msra.mxu0 %v1166
        %2110 = vmatpush.bf16.msra.mxu0 %v1162
        %2111 = vmatpush.bf16.msra.mxu0 %v1158
        %2112 = vmatpush.bf16.msra.mxu0 %v1154
        %2113 = vmatmul.bf16.gmra.mxu0 %v2091
        %v2114 = vpop.f32.mrf.mxu0
        %v2115 = vadd.f32 0.0, %v2114
        %v2116 = vpop.f32.mrf.mxu0
        %2117 = vdwg.mxu0
        %2118 = vmatpush.bf16.msra.mxu0 %v1183
        %2119 = vmatpush.bf16.msra.mxu0 %v1179
        %2120 = vmatpush.bf16.msra.mxu0 %v1175
        %2121 = vmatpush.bf16.msra.mxu0 %v1171
        %2122 = vmatpush.bf16.msra.mxu0 %v1167
        %2123 = vmatpush.bf16.msra.mxu0 %v1163
        %2124 = vmatpush.bf16.msra.mxu0 %v1159
        %2125 = vmatpush.bf16.msra.mxu0 %v1155
        %2126 = vmatmul.bf16.gmra.mxu0 %v2091
        %v2127 = vpop.f32.mrf.mxu0
        %v2128 = vadd.f32 0.0, %v2127
        %v2129 = vpop.f32.mrf.mxu0
        %2130 = vdwg.mxu0
        %2131 = vmatpush.bf16.msra.mxu0 %v1184
        %2132 = vmatpush.bf16.msra.mxu0 %v1180
        %2133 = vmatpush.bf16.msra.mxu0 %v1176
        %2134 = vmatpush.bf16.msra.mxu0 %v1172
        %2135 = vmatpush.bf16.msra.mxu0 %v1168
        %2136 = vmatpush.bf16.msra.mxu0 %v1164
        %2137 = vmatpush.bf16.msra.mxu0 %v1160
        %2138 = vmatpush.bf16.msra.mxu0 %v1156
        %2139 = vmatmul.bf16.gmra.mxu0 %v2091
        %v2140 = vpop.f32.mrf.mxu0
        %v2141 = vadd.f32 0.0, %v2140
        %v2142 = vpop.f32.mrf.mxu0
        %2143 = vdwg.mxu0
        %v2144 = vadd.f32 %v2087, %v2102
        %v2145 = vadd.f32 %v2088, %v2115
        %v2146 = vadd.f32 %v2089, %v2128
        %v2147 = vadd.f32 %v2090, %v2141
        %v2148 = vxor.u32 %v2144, 2147483648
        %v2149 = vmul.f32 %v2148, 1.442695
        %v2150 = vpow.pop %v2149
        %v2151 = vadd.f32 %v2150, 1.0
        %v2152 = vrcp.pop %v2151
        %v2153 = vmul.f32 %v2151, %v2152
        %v2154 = vsub.f32 1.0, %v2153
        %v2155 = vmul.f32 %v2152, %v2154
        %v2156 = vadd.f32 %v2152, %v2155
        %vm2157 = vweird.f32 %v2151
        %vm2158 = vweird.f32 %v2152
        %vm2159 = vmor %vm2157, %vm2158
        %v2160 = vsel %vm2159, %v2152, %v2156
        %v2161 = vand.u32 2147483647, %v2151
        %vm2162 = vcmp.eq.f32.partialorder %v2161, 8.507059e+37
        %v2163 = vand.u32 %v2151, 2147483648
        %v2164 = vor.u32 1.1754944e-38, %v2163
        %v2165 = vsel %vm2162, %v2164, %v2160
        %v2166 = vmul.f32 1.0, %v2165
        %v2167 = vxor.u32 %v2145, 2147483648
        %v2168 = vmul.f32 %v2167, 1.442695
        %v2169 = vpow.pop %v2168
        %v2170 = vadd.f32 %v2169, 1.0
        %v2171 = vrcp.pop %v2170
        %v2172 = vmul.f32 %v2170, %v2171
        %v2173 = vsub.f32 1.0, %v2172
        %v2174 = vmul.f32 %v2171, %v2173
        %v2175 = vadd.f32 %v2171, %v2174
        %vm2176 = vweird.f32 %v2170
        %vm2177 = vweird.f32 %v2171
        %vm2178 = vmor %vm2176, %vm2177
        %v2179 = vsel %vm2178, %v2171, %v2175
        %v2180 = vand.u32 2147483647, %v2170
        %vm2181 = vcmp.eq.f32.partialorder %v2180, 8.507059e+37
        %v2182 = vand.u32 %v2170, 2147483648
        %v2183 = vor.u32 1.1754944e-38, %v2182
        %v2184 = vsel %vm2181, %v2183, %v2179
        %v2185 = vmul.f32 1.0, %v2184
        %v2186 = vtanh.pop %v2146
        %v2187 = vxor.u32 %v2147, 2147483648
        %v2188 = vmul.f32 %v2187, 1.442695
        %v2189 = vpow.pop %v2188
        %v2190 = vadd.f32 %v2189, 1.0
        %v2191 = vrcp.pop %v2190
        %v2192 = vmul.f32 %v2190, %v2191
        %v2193 = vsub.f32 1.0, %v2192
        %v2194 = vmul.f32 %v2191, %v2193
        %v2195 = vadd.f32 %v2191, %v2194
        %vm2196 = vweird.f32 %v2190
        %vm2197 = vweird.f32 %v2191
        %vm2198 = vmor %vm2196, %vm2197
        %v2199 = vsel %vm2198, %v2191, %v2195
        %v2200 = vand.u32 2147483647, %v2190
        %vm2201 = vcmp.eq.f32.partialorder %v2200, 8.507059e+37
        %v2202 = vand.u32 %v2190, 2147483648
        %v2203 = vor.u32 1.1754944e-38, %v2202
        %v2204 = vsel %vm2201, %v2203, %v2199
        %v2205 = vmul.f32 1.0, %v2204
        %v2206 = vmul.f32 %v2185, %v2083
        %v2207 = vmul.f32 %v2166, %v2186
        %v2208 = vadd.f32 %v2206, %v2207
        %v2209 = vtanh.pop %v2208
        %v2210 = vmul.f32 %v2205, %v2209
        %2211 = vst [vmem:[#allocation2 + $0x38] sm:$0xff] %v2210
        %p2212 = scmp.eq.s32.totalorder %s27, 1
        // Predicated region
        $region81: #{tpu_custom_call.1} parent=59 // pred_check
          %p2213 = pneg %p2212
        $region82: #{tpu_custom_call.1} parent=59 // pred_check_branch
          %2215 = sbr.rel (%p2213) target = $region84
        $region83: #{tpu_custom_call.1} parent=59 // pred_region
          %v2216 = vpack.c.bf16 %v2210, %v2210
          %v2217 = vld [vmem:[#allocation10] sm:$0xf]
          %v2218 = vld [vmem:[#allocation10 + $0x4] sm:$0xf]
          %v2219 = vld [vmem:[#allocation10 + $0x8] sm:$0xf]
          %v2220 = vld [vmem:[#allocation10 + $0xc] sm:$0xf]
          %v2221 = vld [vmem:[#allocation10 + $0x10] sm:$0xf]
          %v2222 = vld [vmem:[#allocation10 + $0x14] sm:$0xf]
          %v2223 = vld [vmem:[#allocation10 + $0x18] sm:$0xf]
          %v2224 = vld [vmem:[#allocation10 + $0x1c] sm:$0xf]
          %v2225 = vld [vmem:[#allocation10 + $0x20] sm:$0xf]
          %v2226 = vld [vmem:[#allocation10 + $0x24] sm:$0xf]
          %v2227 = vld [vmem:[#allocation10 + $0x28] sm:$0xf]
          %v2228 = vld [vmem:[#allocation10 + $0x2c] sm:$0xf]
          %v2229 = vld [vmem:[#allocation10 + $0x30] sm:$0xf]
          %v2230 = vld [vmem:[#allocation10 + $0x34] sm:$0xf]
          %v2231 = vld [vmem:[#allocation10 + $0x38] sm:$0xf]
          %v2232 = vld [vmem:[#allocation10 + $0x3c] sm:$0xf]
          %v2233 = vld [vmem:[%s9] sm:$0x1]
          %v2235 = vperm.slane %v2233, 0
          %v2253 = vunpack.c.l.b16 %v2217
          %v2254 = vunpack.c.l.b16 %v2218
          %v2255 = vunpack.c.l.b16 %v2219
          %v2256 = vunpack.c.l.b16 %v2220
          %v2257 = vunpack.c.l.b16 %v2221
          %v2258 = vunpack.c.l.b16 %v2222
          %v2259 = vunpack.c.l.b16 %v2223
          %v2260 = vunpack.c.l.b16 %v2224
          %v2261 = vunpack.c.l.b16 %v2225
          %v2262 = vunpack.c.l.b16 %v2226
          %v2263 = vunpack.c.l.b16 %v2227
          %v2264 = vunpack.c.l.b16 %v2228
          %v2265 = vunpack.c.l.b16 %v2229
          %v2266 = vunpack.c.l.b16 %v2230
          %v2267 = vunpack.c.l.b16 %v2231
          %v2268 = vunpack.c.l.b16 %v2232
          %v2269 = vpack.c.b16 %v2254, %v2253
          %v2270 = vpack.c.b16 %v2256, %v2255
          %v2271 = vpack.c.b16 %v2258, %v2257
          %v2272 = vpack.c.b16 %v2260, %v2259
          %v2273 = vpack.c.b16 %v2262, %v2261
          %v2274 = vpack.c.b16 %v2264, %v2263
          %v2275 = vpack.c.b16 %v2266, %v2265
          %v2276 = vpack.c.b16 %v2268, %v2267
          %2285 = vmatpush.bf16.msra.mxu0 %v2276
          %2286 = vmatpush.bf16.msra.mxu0 %v2275
          %2287 = vmatpush.bf16.msra.mxu0 %v2274
          %2288 = vmatpush.bf16.msra.mxu0 %v2273
          %2289 = vmatpush.bf16.msra.mxu0 %v2272
          %2290 = vmatpush.bf16.msra.mxu0 %v2271
          %2291 = vmatpush.bf16.msra.mxu0 %v2270
          %2292 = vmatpush.bf16.msra.mxu0 %v2269
          %2293 = vmatmul.bf16.gmra.mxu0 %v2216
          %v2294 = vpop.f32.mrf.mxu0
          %v2295 = vadd.f32 %v2235, %v2294
          %v2296 = vpop.f32.mrf.mxu0
          %2297 = vdwg.mxu0
          %2298 = vst [vmem:[#allocation12] sm:$0xff] %v2295
        $region84: #{tpu_custom_call.1} parent=59 // pred_fallthru
          _
        // Predicated region
        $region85: #{tpu_custom_call.1} parent=59 // pred_check
          %p2299 = pneg %p265
        $region86: #{tpu_custom_call.1} parent=59 // pred_check_branch
          %2301 = sbr.rel (%p2299) target = $region88
        $region87: #{tpu_custom_call.1} parent=59 // pred_region
          %2303 = vsyncadd [#allocation6], 0
          %s2305 = sshll.u32 [#allocation12], 4
          %s2306 = int_to_ptr.vmem [resolvable:$true] %s2305
          %s2307 = sshll.u32 %s10, 4
          %s2308 = int_to_ptr.hbm [resolvable:$true] %s2307
          %2310 = dma.vmem_to_hbm [thread:$0]  %s2306, 128, %s2308, [#allocation6]
        $region88: #{tpu_custom_call.1} parent=59 // pred_fallthru
          _
        // Predicated region
        $region89: #{tpu_custom_call.1} parent=59 // pred_check
          %p2311 = pneg %p265
        $region90: #{tpu_custom_call.1} parent=59 // pred_check_branch
          %2313 = sbr.rel (%p2311) target = $region92
        $region91: #{tpu_custom_call.1} parent=59 // pred_region
          %2315 = dma.done [#allocation6], 128
        $region92: #{tpu_custom_call.1} parent=59 // pred_fallthru
          _
      $region60: #{tpu_custom_call.1} parent=5 // pred_fallthru
        _
      %p2316 = scmp.le.s32.totalorder 2, %s22
      // Predicated region
      $region93: #{tpu_custom_call.1} parent=5 // pred_check
        %p2317 = pneg %p2316
      $region94: #{tpu_custom_call.1} parent=5 // pred_check_branch
        %2319 = sbr.rel (%p2317) target = $region96
      $region95: #{tpu_custom_call.1} parent=5 // pred_region
        %s2320 = ssub.s32 %s22, 2
      $region96: #{tpu_custom_call.1} parent=5 // pred_fallthru
        _
    $region6: #{tpu_custom_call.1} parent=1 // loop_footer
      %s26 = sadd.s32 1, %s22
    $region7: #{tpu_custom_call.1} parent=1 // loop_footer_branch
      %21 = sbr.rel target = $region3
    $region8: #{tpu_custom_call.1} parent=1 // loop_exit
      _
    %2321 = vsyncpa [#allocation5], 1
    %s2322 = scalar_lea.sflag [#allocation5], 1
    %2323 = vsyncpa %s2322, 1
    %2324 = vsyncpa [#allocation8], 1
    %s2325 = scalar_lea.sflag [#allocation8], 1
    %2326 = vsyncpa %s2325, 1
    %2327 = vsyncpa [#allocation11], 1
    %2328 = vsyncpa [#allocation6], 1
    %s2329 = scalar_lea.sflag [#allocation6], 1
    %2330 = vsyncpa %s2329, 1

</llo_original>
